<compile_context>
chip_gen: v7x
topology: tpu7x:2x2x1
jax: 0.10.0
libtpu: 0.0.40
codegen_flags: <defaults>
</compile_context>

<pallas_src>
import functools

import jax
import jax.numpy as jnp
from jax import lax
from jax.experimental import pallas as pl
from jax.experimental.pallas import tpu as pltpu


# ------------------------------ Pallas kernel ------------------------------- #

def _fused_cond_self_attn_kernel(x_ref, pos_ref, w_ref, b_ref, wo_ref, bo_ref,
                                 *refs, num_heads, head_dim, compute_dtype,
                                 return_logits):
    if return_logits:
        out_ref, logits_ref, o_scr = refs
    else:
        (out_ref, o_scr), logits_ref = refs, None

    H, D = num_heads, head_dim
    C = H * D
    cdt = compute_dtype
    exact = jnp.dtype(cdt) == jnp.dtype(jnp.float32)

    x_f32 = x_ref[0]                      # (N, C) f32 — residual source
    pos = pos_ref[0]                      # (N, C) compute dtype

    # Single packed projection: [x | pos] (N, 2C) @ (2C, 3C) -> [q | k | v].
    # The 1/sqrt(D) scale is pre-folded into the q block/bias; pos->v block is 0.
    xp = jnp.concatenate([x_f32.astype(cdt), pos], axis=-1)               # (N, 2C)
    proj = (jnp.dot(xp, w_ref[...], preferred_element_type=jnp.float32)
            + b_ref[...])                                                  # (N, 3C) f32

    q = proj[:, :C].astype(cdt)           # already scaled
    k = proj[:, C:2 * C].astype(cdt)
    v = proj[:, 2 * C:].astype(cdt)

    # Single (N,C)->(C,N) transpose per grid step; heads take sublane slices.
    kT = jnp.transpose(k)                 # (C, N)

    for h in range(H):
        lo, hi = h * D, (h + 1) * D
        s = jnp.dot(q[:, lo:hi], kT[lo:hi, :],
                    preferred_element_type=jnp.float32)                    # (N, N) f32
        if return_logits:
            logits_ref[0, h] = s.astype(logits_ref.dtype)

        m = jnp.max(s, axis=-1, keepdims=True)
        e = jnp.exp(s - m)
        denom = jnp.sum(e, axis=-1, keepdims=True)
        # NOTE: approx reciprocal (EUP) on the bf16 path; exact on the f32 path.
        attn = e * pl.reciprocal(denom, approx=not exact)
        o_scr[:, lo:hi] = jnp.dot(attn.astype(cdt), v[:, lo:hi],
                                  preferred_element_type=jnp.float32).astype(cdt)

    # Well-filled K=C out-projection from the VMEM scratch, f32 residual add.
    out = (jnp.dot(o_scr[...], wo_ref[...], preferred_element_type=jnp.float32)
           + bo_ref[...] + x_f32)
    out_ref[0] = out.astype(out_ref.dtype)


# ------------------------------- Host wrapper -------------------------------- #

@functools.partial(jax.jit,
                   static_argnames=("num_heads", "compute_dtype", "return_logits"))
def ks_conditional_self_attention(query, query_pos, params, num_heads,
                                  compute_dtype=jnp.bfloat16, return_logits=True):
    """Forward pass matching KSConditionalSelfAttention (batch_first=False;
    key/value/identity/key_pos default to query/query_pos, masks None, drop 0)."""
    N, B, C = query.shape
    H = num_heads
    assert C % H == 0
    D = C // H
    scale = float(D) ** (-0.5)
    cdt = compute_dtype
    exact = jnp.dtype(cdt) == jnp.dtype(jnp.float32)
    logits_dtype = jnp.float32 if exact else jnp.bfloat16

    # (N, B, C) -> (B, N, C): cheap C-contiguous transposes, fused by XLA.
    xb = jnp.transpose(query, (1, 0, 2)).astype(jnp.float32)     # f32: MXU src + residual
    pb = jnp.transpose(query_pos, (1, 0, 2)).astype(cdt)

    # Host-side weight packing: one (2C, 3C) projection operand.
    #   top C rows: [Wqc^T*scale | Wkc^T | Wv^T]   (content)
    #   bot C rows: [Wqp^T*scale | Wkp^T | 0   ]   (positional)
    w_top = jnp.concatenate([params['wqc'].T * scale, params['wkc'].T,
                             params['wv'].T], axis=1)
    w_bot = jnp.concatenate([params['wqp'].T * scale, params['wkp'].T,
                             jnp.zeros((C, C), jnp.float32)], axis=1)
    w_pack = jnp.concatenate([w_top, w_bot], axis=0).astype(cdt)           # (2C, 3C)
    b_pack = jnp.concatenate([(params['bqc'] + params['bqp']) * scale,
                              params['bkc'] + params['bkp'],
                              params['bv']]).reshape(1, 3 * C).astype(jnp.float32)
    w_o = params['wo'].T.astype(cdt)                                       # (C, C)
    b_o = params['bo'].reshape(1, C).astype(jnp.float32)

    itemsize = jnp.dtype(cdt).itemsize
    flops = (2 * B * N * (2 * C) * (3 * C)      # packed [x|pos] projection
             + 2 * 2 * B * H * N * N * D        # q@k^T and attn@v
             + 2 * B * N * C * C)               # output projection
    bytes_accessed = (B * N * C * 4                             # x (f32)
                      + B * N * C * itemsize                    # pos
                      + (2 * C * 3 * C + C * C) * itemsize      # weights
                      + (3 * C + C) * 4                         # biases
                      + B * N * C * 4)                          # output
    if return_logits:
        bytes_accessed += B * H * N * N * jnp.dtype(logits_dtype).itemsize
    cost = pl.CostEstimate(flops=flops, transcendentals=B * H * N * N,
                           bytes_accessed=bytes_accessed)

    tok_spec = pl.BlockSpec((1, N, C), lambda b: (b, 0, 0))
    res_spec = lambda shape: pl.BlockSpec(shape, lambda b: (0, 0))   # VMEM-resident

    in_specs = [
        tok_spec,                      # x (f32, aliased with output 0)
        tok_spec,                      # query_pos (compute dtype)
        res_spec((2 * C, 3 * C)),      # packed projection weights
        res_spec((1, 3 * C)),          # packed projection biases
        res_spec((C, C)),              # out-proj weight (pre-transposed)
        res_spec((1, C)),              # out-proj bias
    ]
    out_specs = [pl.BlockSpec((1, N, C), lambda b: (b, 0, 0))]
    out_shape = [jax.ShapeDtypeStruct((B, N, C), jnp.float32)]
    if return_logits:
        out_specs.append(pl.BlockSpec((1, H, N, N), lambda b: (b, 0, 0, 0)))
        out_shape.append(jax.ShapeDtypeStruct((B, H, N, N), logits_dtype))

    results = pl.pallas_call(
        functools.partial(_fused_cond_self_attn_kernel,
                          num_heads=H, head_dim=D, compute_dtype=cdt,
                          return_logits=return_logits),
        grid=(B,),
        in_specs=in_specs,
        out_specs=tuple(out_specs),
        out_shape=tuple(out_shape),
        scratch_shapes=[pltpu.VMEM((N, C), cdt)],        # per-head output scratch
        input_output_aliases={0: 0},                     # reuse x buffer for output
        compiler_params=pltpu.CompilerParams(
            dimension_semantics=("parallel",),
            vmem_limit_bytes=48 * 1024 * 1024),
        cost_estimate=cost,
    )(xb, pb, w_pack, b_pack, w_o, b_o)

    out_bnc = results[0]
    logits = results[1] if return_logits else None

    output = jnp.transpose(out_bnc, (1, 0, 2))           # back to (N, B, C)
    return [output], {'sa_attn_map_logits': logits}


# ------------------------- Deterministic param init -------------------------- #

def init_params(key, embed_dim):
    C = embed_dim
    bound = 1.0 / (C ** 0.5)
    names = ['qc', 'qp', 'kc', 'kp', 'v', 'o']
    params = {}
    keys = jax.random.split(key, 2 * len(names))
    for i, n in enumerate(names):
        params[f'w{n}'] = jax.random.uniform(
            keys[2 * i], (C, C), jnp.float32, -bound, bound)
        params[f'b{n}'] = jax.random.uniform(
            keys[2 * i + 1], (C,), jnp.float32, -bound, bound)
    return params


# --------------------------- Pure-JAX reference ------------------------------ #

def reference(query, query_pos, params, num_heads):
    N, B, C = query.shape
    H, D = num_heads, C // num_heads
    scale = float(D) ** (-0.5)
    lin = lambda x, w, b: x @ w.T + b
    qc = lin(query, params['wqc'], params['bqc'])
    qp = lin(query_pos, params['wqp'], params['bqp'])
    kc = lin(query, params['wkc'], params['bkc'])
    kp = lin(query_pos, params['wkp'], params['bkp'])
    v = lin(query, params['wv'], params['bv'])
    q = (qc + qp).reshape(N, B, H, D).transpose(1, 2, 0, 3) * scale
    k = (kc + kp).reshape(N, B, H, D).transpose(1, 2, 0, 3)
    vv = v.reshape(N, B, H, D).transpose(1, 2, 0, 3)
    logits = jnp.einsum('bhnd,bhmd->bhnm', q, k)
    attn = jax.nn.softmax(logits, axis=-1)
    out = jnp.einsum('bhnm,bhmd->bhnd', attn, vv)
    out = out.transpose(0, 2, 1, 3).reshape(B, N, C)
    out = lin(out, params['wo'], params['bo']).transpose(1, 0, 2)
    return query + out, logits


# ---------------------------------- Main ------------------------------------ #

if __name__ == "__main__":
    N, B, C, H = 8, 2, 32, 4   # num_query, batch, embed_dim, num_heads

    key = jax.random.PRNGKey(0)
    k_params, k_q, k_p = jax.random.split(key, 3)
    params = init_params(k_params, C)
    query = jax.random.normal(k_q, (N, B, C), jnp.float32)
    query_pos = jax.random.normal(k_p, (N, B, C), jnp.float32)

    ref_out, ref_logits = reference(query, query_pos, params, H)

    # float32 path: tight check against the pure-JAX reference.
    outs, aux = ks_conditional_self_attention(
        query, query_pos, params, num_heads=H, compute_dtype=jnp.float32)
    out = jax.block_until_ready(outs[0])
    logits = jax.block_until_ready(aux['sa_attn_map_logits'])
    assert out.shape == (N, B, C)
    assert logits.shape == (B, H, N, N)
    assert jnp.allclose(out, ref_out, atol=1e-4, rtol=1e-4)
    assert jnp.allclose(logits, ref_logits, atol=1e-4, rtol=1e-4)

    # default bf16-MXU path (bf16 logits): f32 accumulation, looser tolerance.
    outs_bf, aux_bf = ks_conditional_self_attention(query, query_pos, params, num_heads=H)
    out_bf = jax.block_until_ready(outs_bf[0])
    logits_bf = jax.block_until_ready(aux_bf['sa_attn_map_logits'])
    assert logits_bf.dtype == jnp.bfloat16
    assert jnp.allclose(out_bf, ref_out, atol=5e-2, rtol=5e-2)
    assert jnp.allclose(logits_bf.astype(jnp.float32), ref_logits, atol=5e-2, rtol=5e-2)

    # logits-free path (no (B,H,N,N) HBM writeback at all).
    outs_nl, aux_nl = ks_conditional_self_attention(
        query, query_pos, params, num_heads=H, return_logits=False)
    out_nl = jax.block_until_ready(outs_nl[0])
    assert aux_nl['sa_attn_map_logits'] is None
    assert jnp.allclose(out_nl, ref_out, atol=5e-2, rtol=5e-2)

    print("KERNEL_OK")
</pallas_src>

<mosaic_0001>
module attributes {stable_mosaic.version = 11 : i64} {
  func.func @_fused_cond_self_attn_kernel(%arg0: i32, %arg1: memref<1x8x32xf32, #tpu.memory_space<vmem>>, %arg2: memref<1x8x32xf32, #tpu.memory_space<vmem>>, %arg3: memref<64x96xf32, #tpu.memory_space<vmem>>, %arg4: memref<1x96xf32, #tpu.memory_space<vmem>>, %arg5: memref<32x32xf32, #tpu.memory_space<vmem>>, %arg6: memref<1x32xf32, #tpu.memory_space<vmem>>, %arg7: memref<1x8x32xf32, #tpu.memory_space<vmem>>, %arg8: memref<1x4x8x8xf32, #tpu.memory_space<vmem>>, %arg9: memref<8x32xf32, #tpu.memory_space<vmem>>) attributes {dimension_semantics = [#tpu.dimension_semantics<parallel>], iteration_bounds = array<i64: 2>, scalar_prefetch = 0 : i64, scratch_operands = 1 : i64, tpu.core_type = #tpu.core_type<tc>, window_params = [{transform_indices = @transform_0, window_bounds = array<i64: 1, 8, 32>}, {transform_indices = @transform_1, window_bounds = array<i64: 1, 8, 32>}, {pipeline_mode = #tpu.pipeline_mode<synchronous>, transform_indices = @transform_2, window_bounds = array<i64: 64, 96>}, {pipeline_mode = #tpu.pipeline_mode<synchronous>, transform_indices = @transform_3, window_bounds = array<i64: 1, 96>}, {pipeline_mode = #tpu.pipeline_mode<synchronous>, transform_indices = @transform_4, window_bounds = array<i64: 32, 32>}, {pipeline_mode = #tpu.pipeline_mode<synchronous>, transform_indices = @transform_5, window_bounds = array<i64: 1, 32>}, {transform_indices = @transform_6, window_bounds = array<i64: 1, 8, 32>}, {transform_indices = @transform_7, window_bounds = array<i64: 1, 4, 8, 8>}]} {
    %c0 = arith.constant 0 : index
    %c0_0 = arith.constant 0 : index
    %c0_1 = arith.constant 0 : index
    %0 = vector.load %arg1[%c0, %c0_0, %c0_1] : memref<1x8x32xf32, #tpu.memory_space<vmem>>, vector<1x8x32xf32>
    %1 = vector.shape_cast %0 : vector<1x8x32xf32> to vector<8x32xf32>
    %c0_2 = arith.constant 0 : index
    %c0_3 = arith.constant 0 : index
    %c0_4 = arith.constant 0 : index
    %2 = vector.load %arg2[%c0_2, %c0_3, %c0_4] : memref<1x8x32xf32, #tpu.memory_space<vmem>>, vector<1x8x32xf32>
    %3 = vector.shape_cast %2 : vector<1x8x32xf32> to vector<8x32xf32>
    %4 = tpu.concatenate %1, %3 in 1 : vector<8x32xf32>, vector<8x32xf32> -> vector<8x64xf32>
    %c0_5 = arith.constant 0 : index
    %c0_6 = arith.constant 0 : index
    %5 = vector.load %arg3[%c0_5, %c0_6] : memref<64x96xf32, #tpu.memory_space<vmem>>, vector<64x96xf32>
    %cst = arith.constant dense<0.000000e+00> : vector<8x96xf32>
    %6 = tpu.matmul %4, %5, %cst {dimension_numbers = #tpu.dot_dimension_numbers<[1], [0], [0], [1], [0, 0, 1, 1], [], []>} : vector<8x64xf32>, vector<64x96xf32>, vector<8x96xf32> -> vector<8x96xf32>
    %c0_7 = arith.constant 0 : index
    %c0_8 = arith.constant 0 : index
    %7 = vector.load %arg4[%c0_7, %c0_8] : memref<1x96xf32, #tpu.memory_space<vmem>>, vector<1x96xf32>
    %8 = vector.broadcast %7 : vector<1x96xf32> to vector<8x96xf32>
    %9 = arith.addf %6, %8 : vector<8x96xf32>
    %10 = vector.extract_strided_slice %9 {offsets = [0, 0], sizes = [8, 32], strides = [1, 1]} : vector<8x96xf32> to vector<8x32xf32>
    %11 = vector.extract_strided_slice %9 {offsets = [0, 32], sizes = [8, 32], strides = [1, 1]} : vector<8x96xf32> to vector<8x32xf32>
    %12 = vector.extract_strided_slice %9 {offsets = [0, 64], sizes = [8, 32], strides = [1, 1]} : vector<8x96xf32> to vector<8x32xf32>
    %13 = tpu.transpose %11, [1, 0] : vector<8x32xf32> -> vector<32x8xf32>
    %14 = vector.extract_strided_slice %10 {offsets = [0, 0], sizes = [8, 8], strides = [1, 1]} : vector<8x32xf32> to vector<8x8xf32>
    %15 = vector.extract_strided_slice %13 {offsets = [0, 0], sizes = [8, 8], strides = [1, 1]} : vector<32x8xf32> to vector<8x8xf32>
    %cst_9 = arith.constant dense<0.000000e+00> : vector<8x8xf32>
    %16 = tpu.matmul %14, %15, %cst_9 {dimension_numbers = #tpu.dot_dimension_numbers<[1], [0], [0], [1], [0, 0, 1, 1], [], []>} : vector<8x8xf32>, vector<8x8xf32>, vector<8x8xf32> -> vector<8x8xf32>
    %c0_10 = arith.constant 0 : index
    %c0_11 = arith.constant 0 : index
    %c0_12 = arith.constant 0 : index
    %c0_13 = arith.constant 0 : index
    %17 = vector.load %arg8[%c0_10, %c0_11, %c0_12, %c0_13] : memref<1x4x8x8xf32, #tpu.memory_space<vmem>>, vector<1x1x8x8xf32>
    %18 = vector.shape_cast %17 : vector<1x1x8x8xf32> to vector<8x8xf32>
    %19 = vector.shape_cast %16 : vector<8x8xf32> to vector<1x1x8x8xf32>
    tpu.vector_store %arg8[%c0_10, %c0_11, %c0_12, %c0_13], %19 {strides = array<i32>} : memref<1x4x8x8xf32, #tpu.memory_space<vmem>>, vector<1x1x8x8xf32>,
    %cst_14 = arith.constant dense<0xFF800000> : vector<8xf32>
    %20 = vector.multi_reduction <maximumf>, %16, %cst_14 [1] : vector<8x8xf32> to vector<8xf32>
    %21 = vector.shape_cast %20 : vector<8xf32> to vector<8x1xf32>
    %22 = vector.broadcast %21 : vector<8x1xf32> to vector<8x8xf32>
    %23 = arith.subf %16, %22 : vector<8x8xf32>
    %24 = math.exp %23 : vector<8x8xf32>
    %cst_15 = arith.constant dense<0.000000e+00> : vector<8xf32>
    %25 = vector.multi_reduction <add>, %24, %cst_15 [1] : vector<8x8xf32> to vector<8xf32>
    %26 = vector.shape_cast %25 : vector<8xf32> to vector<8x1xf32>
    %27 = tpu.reciprocal %26 : vector<8x1xf32> -> vector<8x1xf32>
    %28 = vector.broadcast %27 : vector<8x1xf32> to vector<8x8xf32>
    %29 = arith.mulf %24, %28 : vector<8x8xf32>
    %30 = vector.extract_strided_slice %12 {offsets = [0, 0], sizes = [8, 8], strides = [1, 1]} : vector<8x32xf32> to vector<8x8xf32>
    %cst_16 = arith.constant dense<0.000000e+00> : vector<8x8xf32>
    %31 = tpu.matmul %29, %30, %cst_16 {dimension_numbers = #tpu.dot_dimension_numbers<[1], [0], [0], [1], [0, 0, 1, 1], [], []>} : vector<8x8xf32>, vector<8x8xf32>, vector<8x8xf32> -> vector<8x8xf32>
    %c0_17 = arith.constant 0 : index
    %c0_18 = arith.constant 0 : index
    %32 = vector.load %arg9[%c0_17, %c0_18] : memref<8x32xf32, #tpu.memory_space<vmem>>, vector<8x8xf32>
    tpu.vector_store %arg9[%c0_17, %c0_18], %31 {strides = array<i32>} : memref<8x32xf32, #tpu.memory_space<vmem>>, vector<8x8xf32>,
    %33 = vector.extract_strided_slice %10 {offsets = [0, 8], sizes = [8, 8], strides = [1, 1]} : vector<8x32xf32> to vector<8x8xf32>
    %34 = vector.extract_strided_slice %13 {offsets = [8, 0], sizes = [8, 8], strides = [1, 1]} : vector<32x8xf32> to vector<8x8xf32>
    %cst_19 = arith.constant dense<0.000000e+00> : vector<8x8xf32>
    %35 = tpu.matmul %33, %34, %cst_19 {dimension_numbers = #tpu.dot_dimension_numbers<[1], [0], [0], [1], [0, 0, 1, 1], [], []>} : vector<8x8xf32>, vector<8x8xf32>, vector<8x8xf32> -> vector<8x8xf32>
    %c0_20 = arith.constant 0 : index
    %c1 = arith.constant 1 : index
    %c0_21 = arith.constant 0 : index
    %c0_22 = arith.constant 0 : index
    %36 = vector.load %arg8[%c0_20, %c1, %c0_21, %c0_22] : memref<1x4x8x8xf32, #tpu.memory_space<vmem>>, vector<1x1x8x8xf32>
    %37 = vector.shape_cast %36 : vector<1x1x8x8xf32> to vector<8x8xf32>
    %38 = vector.shape_cast %35 : vector<8x8xf32> to vector<1x1x8x8xf32>
    tpu.vector_store %arg8[%c0_20, %c1, %c0_21, %c0_22], %38 {strides = array<i32>} : memref<1x4x8x8xf32, #tpu.memory_space<vmem>>, vector<1x1x8x8xf32>,
    %cst_23 = arith.constant dense<0xFF800000> : vector<8xf32>
    %39 = vector.multi_reduction <maximumf>, %35, %cst_23 [1] : vector<8x8xf32> to vector<8xf32>
    %40 = vector.shape_cast %39 : vector<8xf32> to vector<8x1xf32>
    %41 = vector.broadcast %40 : vector<8x1xf32> to vector<8x8xf32>
    %42 = arith.subf %35, %41 : vector<8x8xf32>
    %43 = math.exp %42 : vector<8x8xf32>
    %cst_24 = arith.constant dense<0.000000e+00> : vector<8xf32>
    %44 = vector.multi_reduction <add>, %43, %cst_24 [1] : vector<8x8xf32> to vector<8xf32>
    %45 = vector.shape_cast %44 : vector<8xf32> to vector<8x1xf32>
    %46 = tpu.reciprocal %45 : vector<8x1xf32> -> vector<8x1xf32>
    %47 = vector.broadcast %46 : vector<8x1xf32> to vector<8x8xf32>
    %48 = arith.mulf %43, %47 : vector<8x8xf32>
    %49 = vector.extract_strided_slice %12 {offsets = [0, 8], sizes = [8, 8], strides = [1, 1]} : vector<8x32xf32> to vector<8x8xf32>
    %cst_25 = arith.constant dense<0.000000e+00> : vector<8x8xf32>
    %50 = tpu.matmul %48, %49, %cst_25 {dimension_numbers = #tpu.dot_dimension_numbers<[1], [0], [0], [1], [0, 0, 1, 1], [], []>} : vector<8x8xf32>, vector<8x8xf32>, vector<8x8xf32> -> vector<8x8xf32>
    %c0_26 = arith.constant 0 : index
    %c8 = arith.constant 8 : index
    %51 = vector.load %arg9[%c0_26, %c8] : memref<8x32xf32, #tpu.memory_space<vmem>>, vector<8x8xf32>
    tpu.vector_store %arg9[%c0_26, %c8], %50 {strides = array<i32>} : memref<8x32xf32, #tpu.memory_space<vmem>>, vector<8x8xf32>,
    %52 = vector.extract_strided_slice %10 {offsets = [0, 16], sizes = [8, 8], strides = [1, 1]} : vector<8x32xf32> to vector<8x8xf32>
    %53 = vector.extract_strided_slice %13 {offsets = [16, 0], sizes = [8, 8], strides = [1, 1]} : vector<32x8xf32> to vector<8x8xf32>
    %cst_27 = arith.constant dense<0.000000e+00> : vector<8x8xf32>
    %54 = tpu.matmul %52, %53, %cst_27 {dimension_numbers = #tpu.dot_dimension_numbers<[1], [0], [0], [1], [0, 0, 1, 1], [], []>} : vector<8x8xf32>, vector<8x8xf32>, vector<8x8xf32> -> vector<8x8xf32>
    %c0_28 = arith.constant 0 : index
    %c2 = arith.constant 2 : index
    %c0_29 = arith.constant 0 : index
    %c0_30 = arith.constant 0 : index
    %55 = vector.load %arg8[%c0_28, %c2, %c0_29, %c0_30] : memref<1x4x8x8xf32, #tpu.memory_space<vmem>>, vector<1x1x8x8xf32>
    %56 = vector.shape_cast %55 : vector<1x1x8x8xf32> to vector<8x8xf32>
    %57 = vector.shape_cast %54 : vector<8x8xf32> to vector<1x1x8x8xf32>
    tpu.vector_store %arg8[%c0_28, %c2, %c0_29, %c0_30], %57 {strides = array<i32>} : memref<1x4x8x8xf32, #tpu.memory_space<vmem>>, vector<1x1x8x8xf32>,
    %cst_31 = arith.constant dense<0xFF800000> : vector<8xf32>
    %58 = vector.multi_reduction <maximumf>, %54, %cst_31 [1] : vector<8x8xf32> to vector<8xf32>
    %59 = vector.shape_cast %58 : vector<8xf32> to vector<8x1xf32>
    %60 = vector.broadcast %59 : vector<8x1xf32> to vector<8x8xf32>
    %61 = arith.subf %54, %60 : vector<8x8xf32>
    %62 = math.exp %61 : vector<8x8xf32>
    %cst_32 = arith.constant dense<0.000000e+00> : vector<8xf32>
    %63 = vector.multi_reduction <add>, %62, %cst_32 [1] : vector<8x8xf32> to vector<8xf32>
    %64 = vector.shape_cast %63 : vector<8xf32> to vector<8x1xf32>
    %65 = tpu.reciprocal %64 : vector<8x1xf32> -> vector<8x1xf32>
    %66 = vector.broadcast %65 : vector<8x1xf32> to vector<8x8xf32>
    %67 = arith.mulf %62, %66 : vector<8x8xf32>
    %68 = vector.extract_strided_slice %12 {offsets = [0, 16], sizes = [8, 8], strides = [1, 1]} : vector<8x32xf32> to vector<8x8xf32>
    %cst_33 = arith.constant dense<0.000000e+00> : vector<8x8xf32>
    %69 = tpu.matmul %67, %68, %cst_33 {dimension_numbers = #tpu.dot_dimension_numbers<[1], [0], [0], [1], [0, 0, 1, 1], [], []>} : vector<8x8xf32>, vector<8x8xf32>, vector<8x8xf32> -> vector<8x8xf32>
    %c0_34 = arith.constant 0 : index
    %c16 = arith.constant 16 : index
    %70 = vector.load %arg9[%c0_34, %c16] : memref<8x32xf32, #tpu.memory_space<vmem>>, vector<8x8xf32>
    tpu.vector_store %arg9[%c0_34, %c16], %69 {strides = array<i32>} : memref<8x32xf32, #tpu.memory_space<vmem>>, vector<8x8xf32>,
    %71 = vector.extract_strided_slice %10 {offsets = [0, 24], sizes = [8, 8], strides = [1, 1]} : vector<8x32xf32> to vector<8x8xf32>
    %72 = vector.extract_strided_slice %13 {offsets = [24, 0], sizes = [8, 8], strides = [1, 1]} : vector<32x8xf32> to vector<8x8xf32>
    %cst_35 = arith.constant dense<0.000000e+00> : vector<8x8xf32>
    %73 = tpu.matmul %71, %72, %cst_35 {dimension_numbers = #tpu.dot_dimension_numbers<[1], [0], [0], [1], [0, 0, 1, 1], [], []>} : vector<8x8xf32>, vector<8x8xf32>, vector<8x8xf32> -> vector<8x8xf32>
    %c0_36 = arith.constant 0 : index
    %c3 = arith.constant 3 : index
    %c0_37 = arith.constant 0 : index
    %c0_38 = arith.constant 0 : index
    %74 = vector.load %arg8[%c0_36, %c3, %c0_37, %c0_38] : memref<1x4x8x8xf32, #tpu.memory_space<vmem>>, vector<1x1x8x8xf32>
    %75 = vector.shape_cast %74 : vector<1x1x8x8xf32> to vector<8x8xf32>
    %76 = vector.shape_cast %73 : vector<8x8xf32> to vector<1x1x8x8xf32>
    tpu.vector_store %arg8[%c0_36, %c3, %c0_37, %c0_38], %76 {strides = array<i32>} : memref<1x4x8x8xf32, #tpu.memory_space<vmem>>, vector<1x1x8x8xf32>,
    %cst_39 = arith.constant dense<0xFF800000> : vector<8xf32>
    %77 = vector.multi_reduction <maximumf>, %73, %cst_39 [1] : vector<8x8xf32> to vector<8xf32>
    %78 = vector.shape_cast %77 : vector<8xf32> to vector<8x1xf32>
    %79 = vector.broadcast %78 : vector<8x1xf32> to vector<8x8xf32>
    %80 = arith.subf %73, %79 : vector<8x8xf32>
    %81 = math.exp %80 : vector<8x8xf32>
    %cst_40 = arith.constant dense<0.000000e+00> : vector<8xf32>
    %82 = vector.multi_reduction <add>, %81, %cst_40 [1] : vector<8x8xf32> to vector<8xf32>
    %83 = vector.shape_cast %82 : vector<8xf32> to vector<8x1xf32>
    %84 = tpu.reciprocal %83 : vector<8x1xf32> -> vector<8x1xf32>
    %85 = vector.broadcast %84 : vector<8x1xf32> to vector<8x8xf32>
    %86 = arith.mulf %81, %85 : vector<8x8xf32>
    %87 = vector.extract_strided_slice %12 {offsets = [0, 24], sizes = [8, 8], strides = [1, 1]} : vector<8x32xf32> to vector<8x8xf32>
    %cst_41 = arith.constant dense<0.000000e+00> : vector<8x8xf32>
    %88 = tpu.matmul %86, %87, %cst_41 {dimension_numbers = #tpu.dot_dimension_numbers<[1], [0], [0], [1], [0, 0, 1, 1], [], []>} : vector<8x8xf32>, vector<8x8xf32>, vector<8x8xf32> -> vector<8x8xf32>
    %c0_42 = arith.constant 0 : index
    %c24 = arith.constant 24 : index
    %89 = vector.load %arg9[%c0_42, %c24] : memref<8x32xf32, #tpu.memory_space<vmem>>, vector<8x8xf32>
    tpu.vector_store %arg9[%c0_42, %c24], %88 {strides = array<i32>} : memref<8x32xf32, #tpu.memory_space<vmem>>, vector<8x8xf32>,
    %c0_43 = arith.constant 0 : index
    %c0_44 = arith.constant 0 : index
    %90 = vector.load %arg9[%c0_43, %c0_44] : memref<8x32xf32, #tpu.memory_space<vmem>>, vector<8x32xf32>
    %c0_45 = arith.constant 0 : index
    %c0_46 = arith.constant 0 : index
    %91 = vector.load %arg5[%c0_45, %c0_46] : memref<32x32xf32, #tpu.memory_space<vmem>>, vector<32x32xf32>
    %cst_47 = arith.constant dense<0.000000e+00> : vector<8x32xf32>
    %92 = tpu.matmul %90, %91, %cst_47 {dimension_numbers = #tpu.dot_dimension_numbers<[1], [0], [0], [1], [0, 0, 1, 1], [], []>} : vector<8x32xf32>, vector<32x32xf32>, vector<8x32xf32> -> vector<8x32xf32>
    %c0_48 = arith.constant 0 : index
    %c0_49 = arith.constant 0 : index
    %93 = vector.load %arg6[%c0_48, %c0_49] : memref<1x32xf32, #tpu.memory_space<vmem>>, vector<1x32xf32>
    %94 = vector.broadcast %93 : vector<1x32xf32> to vector<8x32xf32>
    %95 = arith.addf %92, %94 : vector<8x32xf32>
    %96 = arith.addf %95, %1 : vector<8x32xf32>
    %c0_50 = arith.constant 0 : index
    %c0_51 = arith.constant 0 : index
    %c0_52 = arith.constant 0 : index
    %97 = vector.load %arg7[%c0_50, %c0_51, %c0_52] : memref<1x8x32xf32, #tpu.memory_space<vmem>>, vector<1x8x32xf32>
    %98 = vector.shape_cast %97 : vector<1x8x32xf32> to vector<8x32xf32>
    %99 = vector.shape_cast %96 : vector<8x32xf32> to vector<1x8x32xf32>
    tpu.vector_store %arg7[%c0_50, %c0_51, %c0_52], %99 {strides = array<i32>} : memref<1x8x32xf32, #tpu.memory_space<vmem>>, vector<1x8x32xf32>,
    return
  }
  func.func @transform_0(%arg0: i32) -> (i32, i32, i32) {
    %c0_i32 = arith.constant 0 : i32
    %c0_i32_0 = arith.constant 0 : i32
    %c0_i32_1 = arith.constant 0 : i32
    return %arg0, %c0_i32, %c0_i32_0 : i32, i32, i32
  }
  func.func @transform_1(%arg0: i32) -> (i32, i32, i32) {
    %c0_i32 = arith.constant 0 : i32
    %c0_i32_0 = arith.constant 0 : i32
    %c0_i32_1 = arith.constant 0 : i32
    return %arg0, %c0_i32, %c0_i32_0 : i32, i32, i32
  }
  func.func @transform_2(%arg0: i32) -> (i32, i32) {
    %c0_i32 = arith.constant 0 : i32
    %c0_i32_0 = arith.constant 0 : i32
    %c0_i32_1 = arith.constant 0 : i32
    return %c0_i32, %c0_i32_0 : i32, i32
  }
  func.func @transform_3(%arg0: i32) -> (i32, i32) {
    %c0_i32 = arith.constant 0 : i32
    %c0_i32_0 = arith.constant 0 : i32
    %c0_i32_1 = arith.constant 0 : i32
    return %c0_i32, %c0_i32_0 : i32, i32
  }
  func.func @transform_4(%arg0: i32) -> (i32, i32) {
    %c0_i32 = arith.constant 0 : i32
    %c0_i32_0 = arith.constant 0 : i32
    %c0_i32_1 = arith.constant 0 : i32
    return %c0_i32, %c0_i32_0 : i32, i32
  }
  func.func @transform_5(%arg0: i32) -> (i32, i32) {
    %c0_i32 = arith.constant 0 : i32
    %c0_i32_0 = arith.constant 0 : i32
    %c0_i32_1 = arith.constant 0 : i32
    return %c0_i32, %c0_i32_0 : i32, i32
  }
  func.func @transform_6(%arg0: i32) -> (i32, i32, i32) {
    %c0_i32 = arith.constant 0 : i32
    %c0_i32_0 = arith.constant 0 : i32
    %c0_i32_1 = arith.constant 0 : i32
    return %arg0, %c0_i32, %c0_i32_0 : i32, i32, i32
  }
  func.func @transform_7(%arg0: i32) -> (i32, i32, i32, i32) {
    %c0_i32 = arith.constant 0 : i32
    %c0_i32_0 = arith.constant 0 : i32
    %c0_i32_1 = arith.constant 0 : i32
    %c0_i32_2 = arith.constant 0 : i32
    return %arg0, %c0_i32, %c0_i32_0, %c0_i32_1 : i32, i32, i32, i32
  }
}

</mosaic_0001>

<llo_original>
// kernel: ks_conditional_self_attention.1
$region0: #{ks_conditional_self_attention.1}
  #allocation0 [shape = 'u32[]', space=smem, size = 0x4, offset = 0x4, fixed_abs, tag = 'smem constant byte address 0x4 - core index']
  #allocation1 [shape = 'u32[144,128]{1,0:T(1,128)}', space=vmem, size = 0x12000, scoped, tag = 'internal scratch']
  #allocation2 [shape = 'f32[8,32]{1,0:T(8,128)}', space=vmem, size = 0x1000, scoped, tag = 'scratch operand']
  %s0 = inlined_call_operand.vmem [shape: f32[2,8,32], index: 0, kind: input, shape index: {}, may-alias: {0,6}]
  %s1 = inlined_call_operand.vmem [shape: f32[2,8,32], index: 1, kind: input, shape index: {}]
  %s2 = inlined_call_operand.vmem [shape: f32[64,96], index: 2, kind: input, shape index: {}]
  %s3 = inlined_call_operand.vmem [shape: f32[1,96], index: 3, kind: input, shape index: {}]
  %s4 = inlined_call_operand.vmem [shape: f32[32,32], index: 4, kind: input, shape index: {}]
  %s5 = inlined_call_operand.vmem [shape: f32[1,32], index: 5, kind: input, shape index: {}]
  %s6 = inlined_call_operand.vmem [shape: f32[2,8,32], index: 6, kind: output, shape index: {0}, may-alias: {0,6}]
  %s7 = inlined_call_operand.hbm [shape: f32[2,4,8,8], index: 7, kind: output, shape index: {1}]
  %8 = xla_tuple %s6, %s7
  %s9 = sld [smem:[#allocation0]]
  $region65: #{ks_conditional_self_attention.1} parent=0
    _
  %s11 = ssub.s32 1, %s9
  %s12 = scalar_select 0, %s11, %s9
  $region1: #{ks_conditional_self_attention.1} parent=0
    #allocation3 [shape = 'u8[32768]{0}', space=vmem, size = 0x8000, scoped, tag = 'output window, operand 1']
    #allocation4 [shape = 's32[2]{0}', space=sflag, size = 0x8, scoped, tag = 'scoped memory for ks_conditional_self_attention.1']
    %13 = vsyncpa [#allocation4], 0
    %s14 = scalar_lea.sflag [#allocation4], 1
    %15 = vsyncpa %s14, 0
    loop: start=0, step=1, limit=4
    $region2: #{ks_conditional_self_attention.1} parent=1 // loop_pre_header
      _
    $region3: #{ks_conditional_self_attention.1} parent=1 // loop_header
      %s17 = sphi 0, %s21
      %p18 = scmp.ge.s32.totalorder %s17, 4
      %s27 = sphi 0, %s29
      %s30 = sphi 0, %s27
      %s31 = sphi 0, %s30
      %s47 = sphi 0, %s31
      %s53 = sphi 0, %s55
      %s56 = sphi 0, %s53
      %s57 = sphi 0, %s56
      %s73 = sphi 0, %s57
      %s77 = sphi 0, %s77
      %s79 = sphi 0, %s77
      %s80 = sphi 0, %s79
      %s94 = sphi 0, %s80
      %s98 = sphi 0, %s98
      %s100 = sphi 0, %s98
      %s101 = sphi 0, %s100
      %s115 = sphi 0, %s101
      %s119 = sphi 0, %s119
      %s121 = sphi 0, %s119
      %s122 = sphi 0, %s121
      %s136 = sphi 0, %s122
      %s140 = sphi 0, %s140
      %s142 = sphi 0, %s140
      %s143 = sphi 0, %s142
      %s157 = sphi 0, %s143
      %s163 = sphi 0, %s165
      %s166 = sphi 0, %s163
      %s167 = sphi 0, %s166
      %s183 = sphi 0, %s167
      %s189 = sphi 0, %s191
      %s192 = sphi 0, %s189
      %s193 = sphi 0, %s192
      %s209 = sphi 0, %s193
    $region4: #{ks_conditional_self_attention.1} parent=1 // loop_header_branch
      %20 = sbr.rel (%p18) target = $region8
    $region5: #{ks_conditional_self_attention.1} parent=1 // loop_body
      %s22 = ssub.s32 %s17, 1
      %s23 = ssub.s32 %s17, 2
      %s24 = sadd.s32 %s17, 1
      %s25 = ssub.s32 %s17, %s24
      %p26 = scmp.eq.s32.totalorder %s25, 0
      %s28 = sadd.s32 %s27, 1
      %s29 = scalar_select %p26, %s27, %s28
      %p32 = pneg %p26
      %p33 = scmp.eq.s32.totalorder %s17, 1
      %p34 = por %p32, %p33
      %p35 = scmp.ne.s32.totalorder %s27, %s30
      %p36 = scmp.eq.s32.totalorder %s17, 0
      %p37 = por %p35, %p36
      %p38 = scmp.ne.s32.totalorder %s27, %s30
      %p39 = scmp.eq.s32.totalorder %s22, 1
      %p40 = por %p38, %p39
      %p41 = scmp.ne.s32.totalorder %s30, %s31
      %p42 = scmp.eq.s32.totalorder %s22, 0
      %p43 = por %p41, %p42
      %p44 = scmp.ne.s32.totalorder %s30, %s31
      %p45 = scmp.eq.s32.totalorder %s23, 1
      %p46 = por %p44, %p45
      %p48 = scmp.ne.s32.totalorder %s31, %s47
      %p49 = scmp.eq.s32.totalorder %s23, 0
      %p50 = por %p48, %p49
      %s51 = ssub.s32 %s17, %s24
      %p52 = scmp.eq.s32.totalorder %s51, 0
      %s54 = sadd.s32 %s53, 1
      %s55 = scalar_select %p52, %s53, %s54
      %p58 = pneg %p52
      %p59 = scmp.eq.s32.totalorder %s17, 1
      %p60 = por %p58, %p59
      %p61 = scmp.ne.s32.totalorder %s53, %s56
      %p62 = scmp.eq.s32.totalorder %s17, 0
      %p63 = por %p61, %p62
      %p64 = scmp.ne.s32.totalorder %s53, %s56
      %p65 = scmp.eq.s32.totalorder %s22, 1
      %p66 = por %p64, %p65
      %p67 = scmp.ne.s32.totalorder %s56, %s57
      %p68 = scmp.eq.s32.totalorder %s22, 0
      %p69 = por %p67, %p68
      %p70 = scmp.ne.s32.totalorder %s56, %s57
      %p71 = scmp.eq.s32.totalorder %s23, 1
      %p72 = por %p70, %p71
      %p74 = scmp.ne.s32.totalorder %s57, %s73
      %p75 = scmp.eq.s32.totalorder %s23, 0
      %p76 = por %p74, %p75
      %s78 = sadd.s32 %s77, 1
      %p81 = scmp.eq.s32.totalorder %s17, 1
      %p82 = scmp.ne.s32.totalorder %s77, %s79
      %p83 = scmp.eq.s32.totalorder %s17, 0
      %p84 = por %p82, %p83
      %p85 = scmp.ne.s32.totalorder %s77, %s79
      %p86 = scmp.eq.s32.totalorder %s22, 1
      %p87 = por %p85, %p86
      %p88 = scmp.ne.s32.totalorder %s79, %s80
      %p89 = scmp.eq.s32.totalorder %s22, 0
      %p90 = por %p88, %p89
      %p91 = scmp.ne.s32.totalorder %s79, %s80
      %p92 = scmp.eq.s32.totalorder %s23, 1
      %p93 = por %p91, %p92
      %p95 = scmp.ne.s32.totalorder %s80, %s94
      %p96 = scmp.eq.s32.totalorder %s23, 0
      %p97 = por %p95, %p96
      %s99 = sadd.s32 %s98, 1
      %p102 = scmp.eq.s32.totalorder %s17, 1
      %p103 = scmp.ne.s32.totalorder %s98, %s100
      %p104 = scmp.eq.s32.totalorder %s17, 0
      %p105 = por %p103, %p104
      %p106 = scmp.ne.s32.totalorder %s98, %s100
      %p107 = scmp.eq.s32.totalorder %s22, 1
      %p108 = por %p106, %p107
      %p109 = scmp.ne.s32.totalorder %s100, %s101
      %p110 = scmp.eq.s32.totalorder %s22, 0
      %p111 = por %p109, %p110
      %p112 = scmp.ne.s32.totalorder %s100, %s101
      %p113 = scmp.eq.s32.totalorder %s23, 1
      %p114 = por %p112, %p113
      %p116 = scmp.ne.s32.totalorder %s101, %s115
      %p117 = scmp.eq.s32.totalorder %s23, 0
      %p118 = por %p116, %p117
      %s120 = sadd.s32 %s119, 1
      %p123 = scmp.eq.s32.totalorder %s17, 1
      %p124 = scmp.ne.s32.totalorder %s119, %s121
      %p125 = scmp.eq.s32.totalorder %s17, 0
      %p126 = por %p124, %p125
      %p127 = scmp.ne.s32.totalorder %s119, %s121
      %p128 = scmp.eq.s32.totalorder %s22, 1
      %p129 = por %p127, %p128
      %p130 = scmp.ne.s32.totalorder %s121, %s122
      %p131 = scmp.eq.s32.totalorder %s22, 0
      %p132 = por %p130, %p131
      %p133 = scmp.ne.s32.totalorder %s121, %s122
      %p134 = scmp.eq.s32.totalorder %s23, 1
      %p135 = por %p133, %p134
      %p137 = scmp.ne.s32.totalorder %s122, %s136
      %p138 = scmp.eq.s32.totalorder %s23, 0
      %p139 = por %p137, %p138
      %s141 = sadd.s32 %s140, 1
      %p144 = scmp.eq.s32.totalorder %s17, 1
      %p145 = scmp.ne.s32.totalorder %s140, %s142
      %p146 = scmp.eq.s32.totalorder %s17, 0
      %p147 = por %p145, %p146
      %p148 = scmp.ne.s32.totalorder %s140, %s142
      %p149 = scmp.eq.s32.totalorder %s22, 1
      %p150 = por %p148, %p149
      %p151 = scmp.ne.s32.totalorder %s142, %s143
      %p152 = scmp.eq.s32.totalorder %s22, 0
      %p153 = por %p151, %p152
      %p154 = scmp.ne.s32.totalorder %s142, %s143
      %p155 = scmp.eq.s32.totalorder %s23, 1
      %p156 = por %p154, %p155
      %p158 = scmp.ne.s32.totalorder %s143, %s157
      %p159 = scmp.eq.s32.totalorder %s23, 0
      %p160 = por %p158, %p159
      %s161 = ssub.s32 %s17, %s24
      %p162 = scmp.eq.s32.totalorder %s161, 0
      %s164 = sadd.s32 %s163, 1
      %s165 = scalar_select %p162, %s163, %s164
      %p168 = pneg %p162
      %p169 = scmp.eq.s32.totalorder %s17, 1
      %p170 = por %p168, %p169
      %p171 = scmp.ne.s32.totalorder %s163, %s166
      %p172 = scmp.eq.s32.totalorder %s17, 0
      %p173 = por %p171, %p172
      %p174 = scmp.ne.s32.totalorder %s163, %s166
      %p175 = scmp.eq.s32.totalorder %s22, 1
      %p176 = por %p174, %p175
      %p177 = scmp.ne.s32.totalorder %s166, %s167
      %p178 = scmp.eq.s32.totalorder %s22, 0
      %p179 = por %p177, %p178
      %p180 = scmp.ne.s32.totalorder %s166, %s167
      %p181 = scmp.eq.s32.totalorder %s23, 1
      %p182 = por %p180, %p181
      %p184 = scmp.ne.s32.totalorder %s167, %s183
      %p185 = scmp.eq.s32.totalorder %s23, 0
      %p186 = por %p184, %p185
      %s187 = ssub.s32 %s17, %s24
      %p188 = scmp.eq.s32.totalorder %s187, 0
      %s190 = sadd.s32 %s189, 1
      %s191 = scalar_select %p188, %s189, %s190
      %p194 = pneg %p188
      %p195 = scmp.eq.s32.totalorder %s17, 1
      %p196 = por %p194, %p195
      %p197 = scmp.ne.s32.totalorder %s189, %s192
      %p198 = scmp.eq.s32.totalorder %s17, 0
      %p199 = por %p197, %p198
      %p200 = scmp.ne.s32.totalorder %s189, %s192
      %p201 = scmp.eq.s32.totalorder %s22, 1
      %p202 = por %p200, %p201
      %p203 = scmp.ne.s32.totalorder %s192, %s193
      %p204 = scmp.eq.s32.totalorder %s22, 0
      %p205 = por %p203, %p204
      %p206 = scmp.ne.s32.totalorder %s192, %s193
      %p207 = scmp.eq.s32.totalorder %s23, 1
      %p208 = por %p206, %p207
      %p210 = scmp.ne.s32.totalorder %s193, %s209
      %p211 = scmp.eq.s32.totalorder %s23, 0
      %p212 = por %p210, %p211
      %p213 = scmp.le.s32.totalorder 1, %s17
      %p214 = scmp.lt.s32.totalorder %s17, 3
      %p215 = pnand %p213, %p214
      %p216 = pneg %p215
      // Predicated region
      $region9: #{ks_conditional_self_attention.1} parent=5 // pred_check
        _
      $region10: #{ks_conditional_self_attention.1} parent=5 // pred_check_branch
        %218 = sbr.rel (%p215) target = $region12
      $region11: #{ks_conditional_self_attention.1} parent=5 // pred_region
        %s219 = ssub.s32 %s17, 1
        // Predicated region
        $region13: #{ks_conditional_self_attention.1} parent=11 // pred_check
          %p220 = pneg %p90
        $region14: #{ks_conditional_self_attention.1} parent=11 // pred_check_branch
          %222 = sbr.rel (%p220) target = $region16
        $region15: #{ks_conditional_self_attention.1} parent=11 // pred_region
          _
        $region16: #{ks_conditional_self_attention.1} parent=11 // pred_fallthru
          _
        // Predicated region
        $region17: #{ks_conditional_self_attention.1} parent=11 // pred_check
          %p223 = pneg %p111
        $region18: #{ks_conditional_self_attention.1} parent=11 // pred_check_branch
          %225 = sbr.rel (%p223) target = $region20
        $region19: #{ks_conditional_self_attention.1} parent=11 // pred_region
          _
        $region20: #{ks_conditional_self_attention.1} parent=11 // pred_fallthru
          _
        // Predicated region
        $region21: #{ks_conditional_self_attention.1} parent=11 // pred_check
          %p226 = pneg %p132
        $region22: #{ks_conditional_self_attention.1} parent=11 // pred_check_branch
          %228 = sbr.rel (%p226) target = $region24
        $region23: #{ks_conditional_self_attention.1} parent=11 // pred_region
          _
        $region24: #{ks_conditional_self_attention.1} parent=11 // pred_fallthru
          _
        // Predicated region
        $region25: #{ks_conditional_self_attention.1} parent=11 // pred_check
          %p229 = pneg %p153
        $region26: #{ks_conditional_self_attention.1} parent=11 // pred_check_branch
          %231 = sbr.rel (%p229) target = $region28
        $region27: #{ks_conditional_self_attention.1} parent=11 // pred_region
          _
        $region28: #{ks_conditional_self_attention.1} parent=11 // pred_fallthru
          _
      $region12: #{ks_conditional_self_attention.1} parent=5 // pred_fallthru
        _
      %p232 = scmp.lt.s32.totalorder %s17, 2
      // Predicated region
      $region29: #{ks_conditional_self_attention.1} parent=5 // pred_check
        %p233 = pneg %p232
      $region30: #{ks_conditional_self_attention.1} parent=5 // pred_check_branch
        %235 = sbr.rel (%p233) target = $region32
      $region31: #{ks_conditional_self_attention.1} parent=5 // pred_region
        // Predicated region
        $region33: #{ks_conditional_self_attention.1} parent=31 // pred_check
          %p236 = pneg %p37
        $region34: #{ks_conditional_self_attention.1} parent=31 // pred_check_branch
          %238 = sbr.rel (%p236) target = $region36
        $region35: #{ks_conditional_self_attention.1} parent=31 // pred_region
          %p239 = scmp.lt.s32.totalorder %s17, 1
          %s240 = scalar_select %p239, %s17, 1
          %s241 = smul.addr %s240, 8
          %s242 = scalar_lea.vmem %s0, %s241
        $region36: #{ks_conditional_self_attention.1} parent=31 // pred_fallthru
          _
        // Predicated region
        $region37: #{ks_conditional_self_attention.1} parent=31 // pred_check
          %p243 = pneg %p63
        $region38: #{ks_conditional_self_attention.1} parent=31 // pred_check_branch
          %245 = sbr.rel (%p243) target = $region40
        $region39: #{ks_conditional_self_attention.1} parent=31 // pred_region
          %p246 = scmp.lt.s32.totalorder %s17, 1
          %s247 = scalar_select %p246, %s17, 1
          %s248 = smul.addr %s247, 8
          %s249 = scalar_lea.vmem %s1, %s248
        $region40: #{ks_conditional_self_attention.1} parent=31 // pred_fallthru
          _
      $region32: #{ks_conditional_self_attention.1} parent=5 // pred_fallthru
        _
      %p250 = scmp.le.s32.totalorder 1, %s17
      %p251 = scmp.lt.s32.totalorder %s17, 3
      %p252 = pnand %p250, %p251
      %p253 = pneg %p252
      // Predicated region
      $region41: #{ks_conditional_self_attention.1} parent=5 // pred_check
        _
      $region42: #{ks_conditional_self_attention.1} parent=5 // pred_check_branch
        %255 = sbr.rel (%p252) target = $region44
      $region43: #{ks_conditional_self_attention.1} parent=5 // pred_region
        %s256 = ssub.s32 %s17, 1
        %p257 = scmp.lt.s32.totalorder %s22, 1
        %s258 = scalar_select %p257, %s22, 1
        %s259 = smul.addr %s258, 8
        %s260 = scalar_lea.vmem %s0, %s259
        %p261 = pneg %p43
        %p262 = pneg %p40
        %p263 = scmp.lt.s32.totalorder %s22, 1
        %s264 = scalar_select %p263, %s22, 1
        %s265 = smul.addr %s264, 8
        %s266 = scalar_lea.vmem %s1, %s265
        %p267 = pneg %p69
        %p268 = pneg %p66
        %p269 = pneg %p90
        %p270 = pneg %p87
        %p271 = pneg %p111
        %p272 = pneg %p108
        %p273 = pneg %p132
        %p274 = pneg %p129
        %p275 = pneg %p153
        %p276 = pneg %p150
        %p277 = pneg %p179
        %p278 = pneg %p176
        %p279 = scmp.lt.s32.totalorder %s22, 1
        %s280 = scalar_select %p279, %s22, 1
        %s281 = smul.addr %s280, 8
        %s282 = scalar_lea.vmem %s6, %s281
        %p283 = pneg %p205
        %p284 = pneg %p202
        %s285 = sand.u32 %s192, 1
        %s286 = scalar_lea.sflag [#allocation4], %s285
        %s287 = sand.u32 %s192, 1
        %s288 = smul.addr %s287, 32
        %s289 = scalar_lea.vmem [#allocation3], %s288
        %p290 = scmp.lt.s32.totalorder %s22, 1
        %s291 = scalar_select %p290, %s22, 1
        %s292 = smul.addr %s291, 8
        %s293 = scalar_lea.vmem %s0, %s292
        %p294 = scmp.lt.s32.totalorder %s22, 1
        %s295 = scalar_select %p294, %s22, 1
        %s296 = smul.addr %s295, 8
        %s297 = scalar_lea.vmem %s1, %s296
        %p298 = scmp.lt.s32.totalorder %s22, 1
        %s299 = scalar_select %p298, %s22, 1
        %s300 = smul.addr %s299, 8
        %s301 = scalar_lea.vmem %s6, %s300
        %v302 = vld [vmem:[%s293] sm:$0xff]
        %v303 = vld [vmem:[%s297] sm:$0xff]
        %305 = vrot.lane.b32.xlu0 %v303, 32
        %v306 = vpop.permute.xlu0 %305
        %vm308 = vcmask 261120
        %v309 = vsel %vm308, %v302, %v306
        %v310 = vld [vmem:[%s2] sm:$0xff]
        %v311 = vld [vmem:[%s2 + $0x8] sm:$0xff]
        %v312 = vld [vmem:[%s2 + $0x10] sm:$0xff]
        %v313 = vld [vmem:[%s2 + $0x18] sm:$0xff]
        %v314 = vld [vmem:[%s2 + $0x20] sm:$0xff]
        %v315 = vld [vmem:[%s2 + $0x28] sm:$0xff]
        %v316 = vld [vmem:[%s2 + $0x30] sm:$0xff]
        %v317 = vld [vmem:[%s2 + $0x38] sm:$0xff]
        %v318 = vld [vmem:[%s3] sm:$0x1]
        %v320 = vlaneseq
        %v321 = vshrl.u32 %v320, 7
        %v322 = vsub.s32 0, %v321
        %v323 = vrot.slane %v318, %v322
        %vm325 = vcmask 523264
        %v327 = vsel %vm325, %v309, 0
        %329 = vmatprep.subr.mxu0 0.0
        %330 = vmatpush1.msra.mxu0 %v310
        %331 = vmatprep.subr.mxu0 0.0
        %332 = vmatpush1.msra.mxu0 %v311
        %333 = vmatprep.subr.mxu0 0.0
        %334 = vmatpush1.msra.mxu0 %v312
        %335 = vmatprep.subr.mxu0 0.0
        %336 = vmatpush1.msra.mxu0 %v313
        %337 = vmatprep.subr.mxu0 0.0
        %338 = vmatpush1.msra.mxu0 %v314
        %339 = vmatprep.subr.mxu0 0.0
        %340 = vmatpush1.msra.mxu0 %v315
        %341 = vmatprep.subr.mxu0 0.0
        %342 = vmatpush1.msra.mxu0 %v316
        %343 = vmatprep.subr.mxu0 0.0
        %344 = vmatpush1.msra.mxu0 %v317
        %345 = vmatprep.subr.mxu0 0.0
        %346 = vmatpush1.msra.mxu0 0.0
        %347 = vmatprep.subr.mxu0 0.0
        %348 = vmatpush1.msra.mxu0 0.0
        %349 = vmatprep.subr.mxu0 0.0
        %350 = vmatpush1.msra.mxu0 0.0
        %351 = vmatprep.subr.mxu0 0.0
        %352 = vmatpush1.msra.mxu0 0.0
        %353 = vmatprep.subr.mxu0 0.0
        %354 = vmatpush1.msra.mxu0 0.0
        %355 = vmatprep.subr.mxu0 0.0
        %356 = vmatpush1.msra.mxu0 0.0
        %357 = vmatprep.subr.mxu0 0.0
        %358 = vmatpush1.msra.mxu0 0.0
        %359 = vmatprep.subr.mxu0 0.0
        %360 = vmatpush1.msra.mxu0 0.0
        %361 = vmatprep.subr.mxu0 0.0
        %362 = vmatpush1.msra.mxu0 0.0
        %363 = vmatprep.subr.mxu0 0.0
        %364 = vmatpush1.msra.mxu0 0.0
        %365 = vmatprep.subr.mxu0 0.0
        %366 = vmatpush1.msra.mxu0 0.0
        %367 = vmatprep.subr.mxu0 0.0
        %368 = vmatpush1.msra.mxu0 0.0
        %369 = vmatprep.subr.mxu0 0.0
        %370 = vmatpush1.msra.mxu0 0.0
        %371 = vmatprep.subr.mxu0 0.0
        %372 = vmatpush1.msra.mxu0 0.0
        %373 = vmatprep.subr.mxu0 0.0
        %374 = vmatpush1.msra.mxu0 0.0
        %375 = vmatprep.subr.mxu0 0.0
        %376 = vmatpush1.msra.mxu0 0.0
        %377 = vmatprep.subr.mxu0 0.0
        %378 = vmatpush1.msra.mxu0 0.0
        %379 = vmatprep.subr.mxu0 0.0
        %380 = vmatpush1.msra.mxu0 0.0
        %381 = vmatprep.subr.mxu0 0.0
        %382 = vmatpush1.msra.mxu0 0.0
        %383 = vmatprep.subr.mxu0 0.0
        %384 = vmatpush1.msra.mxu0 0.0
        %385 = vmatprep.subr.mxu0 0.0
        %386 = vmatpush1.msra.mxu0 0.0
        %387 = vmatprep.subr.mxu0 0.0
        %388 = vmatpush1.msra.mxu0 0.0
        %389 = vmatprep.subr.mxu0 0.0
        %390 = vmatpush1.msra.mxu0 0.0
        %391 = vmatprep.subr.mxu0 0.0
        %392 = vmatpush1.msra.mxu0 0.0
        %393 = vmatprep.mubr.f32.mxu0 0.0
        %394 = vmatmul.mubr.f32.gmra.mrb[0].mxu0 %v327
        %v395 = vpop.f32.mrb[0].mxu0
        %v396 = vadd.f32 %v323, %v395
        %v397 = vpop.f32.mrb[0].mxu0
        %398 = vdwg.mxu0
        %400 = vrot.lane.b32.xlu0 %v396, 96
        %v401 = vpop.permute.xlu0 %400
        %vm402 = vcmask 64512
        %v403 = vsel %vm402, %v396, 0
        %v405 = vsel %vm402, %v401, 0
        %407 = vmatprep.subr.mxu0 0.0
        %408 = vmatpush1.xpose.msra.mxu0 %v405
        %409 = vmatprep.subr.mxu0 0.0
        %410 = vmatpush1.xpose.msra.mxu0 0.0
        %411 = vmatprep.subr.mxu0 0.0
        %412 = vmatpush1.xpose.msra.mxu0 0.0
        %413 = vmatprep.subr.mxu0 0.0
        %414 = vmatpush1.xpose.msra.mxu0 0.0
        %415 = vmatprep.subr.mxu0 0.0
        %416 = vmatpush1.xpose.msra.mxu0 0.0
        %417 = vmatprep.subr.mxu0 0.0
        %418 = vmatpush1.xpose.msra.mxu0 0.0
        %419 = vmatprep.subr.mxu0 0.0
        %420 = vmatpush1.xpose.msra.mxu0 0.0
        %421 = vmatprep.subr.mxu0 0.0
        %422 = vmatpush1.xpose.msra.mxu0 0.0
        %423 = vmatprep.subr.mxu0 0.0
        %424 = vmatpush1.xpose.msra.mxu0 0.0
        %425 = vmatprep.subr.mxu0 0.0
        %426 = vmatpush1.xpose.msra.mxu0 0.0
        %427 = vmatprep.subr.mxu0 0.0
        %428 = vmatpush1.xpose.msra.mxu0 0.0
        %429 = vmatprep.subr.mxu0 0.0
        %430 = vmatpush1.xpose.msra.mxu0 0.0
        %431 = vmatprep.subr.mxu0 0.0
        %432 = vmatpush1.xpose.msra.mxu0 0.0
        %433 = vmatprep.subr.mxu0 0.0
        %434 = vmatpush1.xpose.msra.mxu0 0.0
        %435 = vmatprep.subr.mxu0 0.0
        %436 = vmatpush1.xpose.msra.mxu0 0.0
        %437 = vmatprep.subr.mxu0 0.0
        %438 = vmatpush1.xpose.msra.mxu0 0.0
        %439 = vmatprep.subr.mxu0 0.0
        %440 = vmatpush1.xpose.msra.mxu0 0.0
        %441 = vmatprep.subr.mxu0 0.0
        %442 = vmatpush1.xpose.msra.mxu0 0.0
        %443 = vmatprep.subr.mxu0 0.0
        %444 = vmatpush1.xpose.msra.mxu0 0.0
        %445 = vmatprep.subr.mxu0 0.0
        %446 = vmatpush1.xpose.msra.mxu0 0.0
        %447 = vmatprep.subr.mxu0 0.0
        %448 = vmatpush1.xpose.msra.mxu0 0.0
        %449 = vmatprep.subr.mxu0 0.0
        %450 = vmatpush1.xpose.msra.mxu0 0.0
        %451 = vmatprep.subr.mxu0 0.0
        %452 = vmatpush1.xpose.msra.mxu0 0.0
        %453 = vmatprep.subr.mxu0 0.0
        %454 = vmatpush1.xpose.msra.mxu0 0.0
        %455 = vmatprep.subr.mxu0 0.0
        %456 = vmatpush1.xpose.msra.mxu0 0.0
        %457 = vmatprep.subr.mxu0 0.0
        %458 = vmatpush1.xpose.msra.mxu0 0.0
        %459 = vmatprep.subr.mxu0 0.0
        %460 = vmatpush1.xpose.msra.mxu0 0.0
        %461 = vmatprep.subr.mxu0 0.0
        %462 = vmatpush1.xpose.msra.mxu0 0.0
        %463 = vmatprep.subr.mxu0 0.0
        %464 = vmatpush1.xpose.msra.mxu0 0.0
        %465 = vmatprep.subr.mxu0 0.0
        %466 = vmatpush1.xpose.msra.mxu0 0.0
        %467 = vmatprep.subr.mxu0 0.0
        %468 = vmatpush1.xpose.msra.mxu0 0.0
        %469 = vmatprep.subr.mxu0 0.0
        %470 = vmatpush1.xpose.msra.mxu0 0.0
        %471 = vmatprep.mubr.f32.mxu0 0.0
        %472 = vmatmul.mubr.f32.gmra.mrb[0].mxu0 %v403
        %v473 = vpop.f32.mrb[0].mxu0
        %v474 = vadd.f32 0.0, %v473
        %v475 = vpop.f32.mrb[0].mxu0
        %476 = vdwg.mxu0
        %477 = vst.msk [vmem:[%s289] sm:$0xff] %vm402, %v474
        %v478 = vsel %vm402, %v474, -inf
        %479 = vmax.xlane.f32.xlu0 %v478
        %v480 = vpop.xlane.xlu0 %479
        %v481 = vsub.f32 %v474, %v480
        %v482 = vmul.f32 %v481, 1.442695
        %v483 = vpow.pop %v482
        %v484 = vsel %vm402, %v483, 0.0
        %485 = vadd.xlane.f32.xlu0 %v484
        %v486 = vpop.xlane.xlu0 %485
        %v487 = vrcp.pop %v486
        %v488 = vmul.f32 %v483, %v487
        %489 = vrot.lane.b32.xlu0 %v396, 64
        %v490 = vpop.permute.xlu0 %489
        %v493 = vsel %vm402, %v488, 0
        %495 = vmatprep.subr.mxu0 0.0
        %496 = vmatpush1.msra.mxu0 %v490
        %497 = vmatprep.subr.mxu0 0.0
        %498 = vmatpush1.msra.mxu0 0.0
        %499 = vmatprep.subr.mxu0 0.0
        %500 = vmatpush1.msra.mxu0 0.0
        %501 = vmatprep.subr.mxu0 0.0
        %502 = vmatpush1.msra.mxu0 0.0
        %503 = vmatprep.subr.mxu0 0.0
        %504 = vmatpush1.msra.mxu0 0.0
        %505 = vmatprep.subr.mxu0 0.0
        %506 = vmatpush1.msra.mxu0 0.0
        %507 = vmatprep.subr.mxu0 0.0
        %508 = vmatpush1.msra.mxu0 0.0
        %509 = vmatprep.subr.mxu0 0.0
        %510 = vmatpush1.msra.mxu0 0.0
        %511 = vmatprep.subr.mxu0 0.0
        %512 = vmatpush1.msra.mxu0 0.0
        %513 = vmatprep.subr.mxu0 0.0
        %514 = vmatpush1.msra.mxu0 0.0
        %515 = vmatprep.subr.mxu0 0.0
        %516 = vmatpush1.msra.mxu0 0.0
        %517 = vmatprep.subr.mxu0 0.0
        %518 = vmatpush1.msra.mxu0 0.0
        %519 = vmatprep.subr.mxu0 0.0
        %520 = vmatpush1.msra.mxu0 0.0
        %521 = vmatprep.subr.mxu0 0.0
        %522 = vmatpush1.msra.mxu0 0.0
        %523 = vmatprep.subr.mxu0 0.0
        %524 = vmatpush1.msra.mxu0 0.0
        %525 = vmatprep.subr.mxu0 0.0
        %526 = vmatpush1.msra.mxu0 0.0
        %527 = vmatprep.subr.mxu0 0.0
        %528 = vmatpush1.msra.mxu0 0.0
        %529 = vmatprep.subr.mxu0 0.0
        %530 = vmatpush1.msra.mxu0 0.0
        %531 = vmatprep.subr.mxu0 0.0
        %532 = vmatpush1.msra.mxu0 0.0
        %533 = vmatprep.subr.mxu0 0.0
        %534 = vmatpush1.msra.mxu0 0.0
        %535 = vmatprep.subr.mxu0 0.0
        %536 = vmatpush1.msra.mxu0 0.0
        %537 = vmatprep.subr.mxu0 0.0
        %538 = vmatpush1.msra.mxu0 0.0
        %539 = vmatprep.subr.mxu0 0.0
        %540 = vmatpush1.msra.mxu0 0.0
        %541 = vmatprep.subr.mxu0 0.0
        %542 = vmatpush1.msra.mxu0 0.0
        %543 = vmatprep.subr.mxu0 0.0
        %544 = vmatpush1.msra.mxu0 0.0
        %545 = vmatprep.subr.mxu0 0.0
        %546 = vmatpush1.msra.mxu0 0.0
        %547 = vmatprep.subr.mxu0 0.0
        %548 = vmatpush1.msra.mxu0 0.0
        %549 = vmatprep.subr.mxu0 0.0
        %550 = vmatpush1.msra.mxu0 0.0
        %551 = vmatprep.subr.mxu0 0.0
        %552 = vmatpush1.msra.mxu0 0.0
        %553 = vmatprep.subr.mxu0 0.0
        %554 = vmatpush1.msra.mxu0 0.0
        %555 = vmatprep.subr.mxu0 0.0
        %556 = vmatpush1.msra.mxu0 0.0
        %557 = vmatprep.subr.mxu0 0.0
        %558 = vmatpush1.msra.mxu0 0.0
        %559 = vmatprep.mubr.f32.mxu0 0.0
        %560 = vmatmul.mubr.f32.gmra.mrb[0].mxu0 %v493
        %v561 = vpop.f32.mrb[0].mxu0
        %v562 = vadd.f32 0.0, %v561
        %v563 = vpop.f32.mrb[0].mxu0
        %564 = vdwg.mxu0
        %565 = vst.msk [vmem:[#allocation2] sm:$0xff] %vm402, %v562
        %566 = vrot.lane.b32.xlu0 %v396, 120
        %v567 = vpop.permute.xlu0 %566
        %568 = vrot.lane.b32.xlu0 %v396, 88
        %v569 = vpop.permute.xlu0 %568
        %v570 = vsel %vm402, %v567, 0
        %v572 = vsel %vm402, %v569, 0
        %574 = vmatprep.subr.mxu0 0.0
        %575 = vmatpush1.xpose.msra.mxu0 %v572
        %576 = vmatprep.subr.mxu0 0.0
        %577 = vmatpush1.xpose.msra.mxu0 0.0
        %578 = vmatprep.subr.mxu0 0.0
        %579 = vmatpush1.xpose.msra.mxu0 0.0
        %580 = vmatprep.subr.mxu0 0.0
        %581 = vmatpush1.xpose.msra.mxu0 0.0
        %582 = vmatprep.subr.mxu0 0.0
        %583 = vmatpush1.xpose.msra.mxu0 0.0
        %584 = vmatprep.subr.mxu0 0.0
        %585 = vmatpush1.xpose.msra.mxu0 0.0
        %586 = vmatprep.subr.mxu0 0.0
        %587 = vmatpush1.xpose.msra.mxu0 0.0
        %588 = vmatprep.subr.mxu0 0.0
        %589 = vmatpush1.xpose.msra.mxu0 0.0
        %590 = vmatprep.subr.mxu0 0.0
        %591 = vmatpush1.xpose.msra.mxu0 0.0
        %592 = vmatprep.subr.mxu0 0.0
        %593 = vmatpush1.xpose.msra.mxu0 0.0
        %594 = vmatprep.subr.mxu0 0.0
        %595 = vmatpush1.xpose.msra.mxu0 0.0
        %596 = vmatprep.subr.mxu0 0.0
        %597 = vmatpush1.xpose.msra.mxu0 0.0
        %598 = vmatprep.subr.mxu0 0.0
        %599 = vmatpush1.xpose.msra.mxu0 0.0
        %600 = vmatprep.subr.mxu0 0.0
        %601 = vmatpush1.xpose.msra.mxu0 0.0
        %602 = vmatprep.subr.mxu0 0.0
        %603 = vmatpush1.xpose.msra.mxu0 0.0
        %604 = vmatprep.subr.mxu0 0.0
        %605 = vmatpush1.xpose.msra.mxu0 0.0
        %606 = vmatprep.subr.mxu0 0.0
        %607 = vmatpush1.xpose.msra.mxu0 0.0
        %608 = vmatprep.subr.mxu0 0.0
        %609 = vmatpush1.xpose.msra.mxu0 0.0
        %610 = vmatprep.subr.mxu0 0.0
        %611 = vmatpush1.xpose.msra.mxu0 0.0
        %612 = vmatprep.subr.mxu0 0.0
        %613 = vmatpush1.xpose.msra.mxu0 0.0
        %614 = vmatprep.subr.mxu0 0.0
        %615 = vmatpush1.xpose.msra.mxu0 0.0
        %616 = vmatprep.subr.mxu0 0.0
        %617 = vmatpush1.xpose.msra.mxu0 0.0
        %618 = vmatprep.subr.mxu0 0.0
        %619 = vmatpush1.xpose.msra.mxu0 0.0
        %620 = vmatprep.subr.mxu0 0.0
        %621 = vmatpush1.xpose.msra.mxu0 0.0
        %622 = vmatprep.subr.mxu0 0.0
        %623 = vmatpush1.xpose.msra.mxu0 0.0
        %624 = vmatprep.subr.mxu0 0.0
        %625 = vmatpush1.xpose.msra.mxu0 0.0
        %626 = vmatprep.subr.mxu0 0.0
        %627 = vmatpush1.xpose.msra.mxu0 0.0
        %628 = vmatprep.subr.mxu0 0.0
        %629 = vmatpush1.xpose.msra.mxu0 0.0
        %630 = vmatprep.subr.mxu0 0.0
        %631 = vmatpush1.xpose.msra.mxu0 0.0
        %632 = vmatprep.subr.mxu0 0.0
        %633 = vmatpush1.xpose.msra.mxu0 0.0
        %634 = vmatprep.subr.mxu0 0.0
        %635 = vmatpush1.xpose.msra.mxu0 0.0
        %636 = vmatprep.subr.mxu0 0.0
        %637 = vmatpush1.xpose.msra.mxu0 0.0
        %638 = vmatprep.mubr.f32.mxu0 0.0
        %639 = vmatmul.mubr.f32.gmra.mrb[0].mxu0 %v570
        %v640 = vpop.f32.mrb[0].mxu0
        %v641 = vadd.f32 0.0, %v640
        %v642 = vpop.f32.mrb[0].mxu0
        %643 = vdwg.mxu0
        %s644 = scalar_lea.vmem %s289, 8 [#allocation3]
        %645 = vst.msk [vmem:[%s644] sm:$0xff] %vm402, %v641
        %v646 = vsel %vm402, %v641, -inf
        %647 = vmax.xlane.f32.xlu0 %v646
        %v648 = vpop.xlane.xlu0 %647
        %v649 = vsub.f32 %v641, %v648
        %v650 = vmul.f32 %v649, 1.442695
        %v651 = vpow.pop %v650
        %v652 = vsel %vm402, %v651, 0.0
        %653 = vadd.xlane.f32.xlu0 %v652
        %v654 = vpop.xlane.xlu0 %653
        %v655 = vrcp.pop %v654
        %v656 = vmul.f32 %v651, %v655
        %657 = vrot.lane.b32.xlu0 %v396, 56
        %v658 = vpop.permute.xlu0 %657
        %v661 = vsel %vm402, %v656, 0
        %663 = vmatprep.subr.mxu0 0.0
        %664 = vmatpush1.msra.mxu0 %v658
        %665 = vmatprep.subr.mxu0 0.0
        %666 = vmatpush1.msra.mxu0 0.0
        %667 = vmatprep.subr.mxu0 0.0
        %668 = vmatpush1.msra.mxu0 0.0
        %669 = vmatprep.subr.mxu0 0.0
        %670 = vmatpush1.msra.mxu0 0.0
        %671 = vmatprep.subr.mxu0 0.0
        %672 = vmatpush1.msra.mxu0 0.0
        %673 = vmatprep.subr.mxu0 0.0
        %674 = vmatpush1.msra.mxu0 0.0
        %675 = vmatprep.subr.mxu0 0.0
        %676 = vmatpush1.msra.mxu0 0.0
        %677 = vmatprep.subr.mxu0 0.0
        %678 = vmatpush1.msra.mxu0 0.0
        %679 = vmatprep.subr.mxu0 0.0
        %680 = vmatpush1.msra.mxu0 0.0
        %681 = vmatprep.subr.mxu0 0.0
        %682 = vmatpush1.msra.mxu0 0.0
        %683 = vmatprep.subr.mxu0 0.0
        %684 = vmatpush1.msra.mxu0 0.0
        %685 = vmatprep.subr.mxu0 0.0
        %686 = vmatpush1.msra.mxu0 0.0
        %687 = vmatprep.subr.mxu0 0.0
        %688 = vmatpush1.msra.mxu0 0.0
        %689 = vmatprep.subr.mxu0 0.0
        %690 = vmatpush1.msra.mxu0 0.0
        %691 = vmatprep.subr.mxu0 0.0
        %692 = vmatpush1.msra.mxu0 0.0
        %693 = vmatprep.subr.mxu0 0.0
        %694 = vmatpush1.msra.mxu0 0.0
        %695 = vmatprep.subr.mxu0 0.0
        %696 = vmatpush1.msra.mxu0 0.0
        %697 = vmatprep.subr.mxu0 0.0
        %698 = vmatpush1.msra.mxu0 0.0
        %699 = vmatprep.subr.mxu0 0.0
        %700 = vmatpush1.msra.mxu0 0.0
        %701 = vmatprep.subr.mxu0 0.0
        %702 = vmatpush1.msra.mxu0 0.0
        %703 = vmatprep.subr.mxu0 0.0
        %704 = vmatpush1.msra.mxu0 0.0
        %705 = vmatprep.subr.mxu0 0.0
        %706 = vmatpush1.msra.mxu0 0.0
        %707 = vmatprep.subr.mxu0 0.0
        %708 = vmatpush1.msra.mxu0 0.0
        %709 = vmatprep.subr.mxu0 0.0
        %710 = vmatpush1.msra.mxu0 0.0
        %711 = vmatprep.subr.mxu0 0.0
        %712 = vmatpush1.msra.mxu0 0.0
        %713 = vmatprep.subr.mxu0 0.0
        %714 = vmatpush1.msra.mxu0 0.0
        %715 = vmatprep.subr.mxu0 0.0
        %716 = vmatpush1.msra.mxu0 0.0
        %717 = vmatprep.subr.mxu0 0.0
        %718 = vmatpush1.msra.mxu0 0.0
        %719 = vmatprep.subr.mxu0 0.0
        %720 = vmatpush1.msra.mxu0 0.0
        %721 = vmatprep.subr.mxu0 0.0
        %722 = vmatpush1.msra.mxu0 0.0
        %723 = vmatprep.subr.mxu0 0.0
        %724 = vmatpush1.msra.mxu0 0.0
        %725 = vmatprep.subr.mxu0 0.0
        %726 = vmatpush1.msra.mxu0 0.0
        %727 = vmatprep.mubr.f32.mxu0 0.0
        %728 = vmatmul.mubr.f32.gmra.mrb[0].mxu0 %v661
        %v729 = vpop.f32.mrb[0].mxu0
        %v730 = vadd.f32 0.0, %v729
        %v731 = vpop.f32.mrb[0].mxu0
        %732 = vdwg.mxu0
        %734 = vrot.lane.b32.xlu0 %v730, 8
        %v735 = vpop.permute.xlu0 %734
        %vm737 = vcmask 130112
        %738 = vst.msk [vmem:[#allocation2] sm:$0xff] %vm737, %v735
        %739 = vrot.lane.b32.xlu0 %v396, 112
        %v740 = vpop.permute.xlu0 %739
        %741 = vrot.lane.b32.xlu0 %v396, 80
        %v742 = vpop.permute.xlu0 %741
        %v743 = vsel %vm402, %v740, 0
        %v745 = vsel %vm402, %v742, 0
        %747 = vmatprep.subr.mxu0 0.0
        %748 = vmatpush1.xpose.msra.mxu0 %v745
        %749 = vmatprep.subr.mxu0 0.0
        %750 = vmatpush1.xpose.msra.mxu0 0.0
        %751 = vmatprep.subr.mxu0 0.0
        %752 = vmatpush1.xpose.msra.mxu0 0.0
        %753 = vmatprep.subr.mxu0 0.0
        %754 = vmatpush1.xpose.msra.mxu0 0.0
        %755 = vmatprep.subr.mxu0 0.0
        %756 = vmatpush1.xpose.msra.mxu0 0.0
        %757 = vmatprep.subr.mxu0 0.0
        %758 = vmatpush1.xpose.msra.mxu0 0.0
        %759 = vmatprep.subr.mxu0 0.0
        %760 = vmatpush1.xpose.msra.mxu0 0.0
        %761 = vmatprep.subr.mxu0 0.0
        %762 = vmatpush1.xpose.msra.mxu0 0.0
        %763 = vmatprep.subr.mxu0 0.0
        %764 = vmatpush1.xpose.msra.mxu0 0.0
        %765 = vmatprep.subr.mxu0 0.0
        %766 = vmatpush1.xpose.msra.mxu0 0.0
        %767 = vmatprep.subr.mxu0 0.0
        %768 = vmatpush1.xpose.msra.mxu0 0.0
        %769 = vmatprep.subr.mxu0 0.0
        %770 = vmatpush1.xpose.msra.mxu0 0.0
        %771 = vmatprep.subr.mxu0 0.0
        %772 = vmatpush1.xpose.msra.mxu0 0.0
        %773 = vmatprep.subr.mxu0 0.0
        %774 = vmatpush1.xpose.msra.mxu0 0.0
        %775 = vmatprep.subr.mxu0 0.0
        %776 = vmatpush1.xpose.msra.mxu0 0.0
        %777 = vmatprep.subr.mxu0 0.0
        %778 = vmatpush1.xpose.msra.mxu0 0.0
        %779 = vmatprep.subr.mxu0 0.0
        %780 = vmatpush1.xpose.msra.mxu0 0.0
        %781 = vmatprep.subr.mxu0 0.0
        %782 = vmatpush1.xpose.msra.mxu0 0.0
        %783 = vmatprep.subr.mxu0 0.0
        %784 = vmatpush1.xpose.msra.mxu0 0.0
        %785 = vmatprep.subr.mxu0 0.0
        %786 = vmatpush1.xpose.msra.mxu0 0.0
        %787 = vmatprep.subr.mxu0 0.0
        %788 = vmatpush1.xpose.msra.mxu0 0.0
        %789 = vmatprep.subr.mxu0 0.0
        %790 = vmatpush1.xpose.msra.mxu0 0.0
        %791 = vmatprep.subr.mxu0 0.0
        %792 = vmatpush1.xpose.msra.mxu0 0.0
        %793 = vmatprep.subr.mxu0 0.0
        %794 = vmatpush1.xpose.msra.mxu0 0.0
        %795 = vmatprep.subr.mxu0 0.0
        %796 = vmatpush1.xpose.msra.mxu0 0.0
        %797 = vmatprep.subr.mxu0 0.0
        %798 = vmatpush1.xpose.msra.mxu0 0.0
        %799 = vmatprep.subr.mxu0 0.0
        %800 = vmatpush1.xpose.msra.mxu0 0.0
        %801 = vmatprep.subr.mxu0 0.0
        %802 = vmatpush1.xpose.msra.mxu0 0.0
        %803 = vmatprep.subr.mxu0 0.0
        %804 = vmatpush1.xpose.msra.mxu0 0.0
        %805 = vmatprep.subr.mxu0 0.0
        %806 = vmatpush1.xpose.msra.mxu0 0.0
        %807 = vmatprep.subr.mxu0 0.0
        %808 = vmatpush1.xpose.msra.mxu0 0.0
        %809 = vmatprep.subr.mxu0 0.0
        %810 = vmatpush1.xpose.msra.mxu0 0.0
        %811 = vmatprep.mubr.f32.mxu0 0.0
        %812 = vmatmul.mubr.f32.gmra.mrb[0].mxu0 %v743
        %v813 = vpop.f32.mrb[0].mxu0
        %v814 = vadd.f32 0.0, %v813
        %v815 = vpop.f32.mrb[0].mxu0
        %816 = vdwg.mxu0
        %s817 = scalar_lea.vmem %s289, 16 [#allocation3]
        %818 = vst.msk [vmem:[%s817] sm:$0xff] %vm402, %v814
        %v819 = vsel %vm402, %v814, -inf
        %820 = vmax.xlane.f32.xlu0 %v819
        %v821 = vpop.xlane.xlu0 %820
        %v822 = vsub.f32 %v814, %v821
        %v823 = vmul.f32 %v822, 1.442695
        %v824 = vpow.pop %v823
        %v825 = vsel %vm402, %v824, 0.0
        %826 = vadd.xlane.f32.xlu0 %v825
        %v827 = vpop.xlane.xlu0 %826
        %v828 = vrcp.pop %v827
        %v829 = vmul.f32 %v824, %v828
        %830 = vrot.lane.b32.xlu0 %v396, 48
        %v831 = vpop.permute.xlu0 %830
        %v834 = vsel %vm402, %v829, 0
        %836 = vmatprep.subr.mxu0 0.0
        %837 = vmatpush1.msra.mxu0 %v831
        %838 = vmatprep.subr.mxu0 0.0
        %839 = vmatpush1.msra.mxu0 0.0
        %840 = vmatprep.subr.mxu0 0.0
        %841 = vmatpush1.msra.mxu0 0.0
        %842 = vmatprep.subr.mxu0 0.0
        %843 = vmatpush1.msra.mxu0 0.0
        %844 = vmatprep.subr.mxu0 0.0
        %845 = vmatpush1.msra.mxu0 0.0
        %846 = vmatprep.subr.mxu0 0.0
        %847 = vmatpush1.msra.mxu0 0.0
        %848 = vmatprep.subr.mxu0 0.0
        %849 = vmatpush1.msra.mxu0 0.0
        %850 = vmatprep.subr.mxu0 0.0
        %851 = vmatpush1.msra.mxu0 0.0
        %852 = vmatprep.subr.mxu0 0.0
        %853 = vmatpush1.msra.mxu0 0.0
        %854 = vmatprep.subr.mxu0 0.0
        %855 = vmatpush1.msra.mxu0 0.0
        %856 = vmatprep.subr.mxu0 0.0
        %857 = vmatpush1.msra.mxu0 0.0
        %858 = vmatprep.subr.mxu0 0.0
        %859 = vmatpush1.msra.mxu0 0.0
        %860 = vmatprep.subr.mxu0 0.0
        %861 = vmatpush1.msra.mxu0 0.0
        %862 = vmatprep.subr.mxu0 0.0
        %863 = vmatpush1.msra.mxu0 0.0
        %864 = vmatprep.subr.mxu0 0.0
        %865 = vmatpush1.msra.mxu0 0.0
        %866 = vmatprep.subr.mxu0 0.0
        %867 = vmatpush1.msra.mxu0 0.0
        %868 = vmatprep.subr.mxu0 0.0
        %869 = vmatpush1.msra.mxu0 0.0
        %870 = vmatprep.subr.mxu0 0.0
        %871 = vmatpush1.msra.mxu0 0.0
        %872 = vmatprep.subr.mxu0 0.0
        %873 = vmatpush1.msra.mxu0 0.0
        %874 = vmatprep.subr.mxu0 0.0
        %875 = vmatpush1.msra.mxu0 0.0
        %876 = vmatprep.subr.mxu0 0.0
        %877 = vmatpush1.msra.mxu0 0.0
        %878 = vmatprep.subr.mxu0 0.0
        %879 = vmatpush1.msra.mxu0 0.0
        %880 = vmatprep.subr.mxu0 0.0
        %881 = vmatpush1.msra.mxu0 0.0
        %882 = vmatprep.subr.mxu0 0.0
        %883 = vmatpush1.msra.mxu0 0.0
        %884 = vmatprep.subr.mxu0 0.0
        %885 = vmatpush1.msra.mxu0 0.0
        %886 = vmatprep.subr.mxu0 0.0
        %887 = vmatpush1.msra.mxu0 0.0
        %888 = vmatprep.subr.mxu0 0.0
        %889 = vmatpush1.msra.mxu0 0.0
        %890 = vmatprep.subr.mxu0 0.0
        %891 = vmatpush1.msra.mxu0 0.0
        %892 = vmatprep.subr.mxu0 0.0
        %893 = vmatpush1.msra.mxu0 0.0
        %894 = vmatprep.subr.mxu0 0.0
        %895 = vmatpush1.msra.mxu0 0.0
        %896 = vmatprep.subr.mxu0 0.0
        %897 = vmatpush1.msra.mxu0 0.0
        %898 = vmatprep.subr.mxu0 0.0
        %899 = vmatpush1.msra.mxu0 0.0
        %900 = vmatprep.mubr.f32.mxu0 0.0
        %901 = vmatmul.mubr.f32.gmra.mrb[0].mxu0 %v834
        %v902 = vpop.f32.mrb[0].mxu0
        %v903 = vadd.f32 0.0, %v902
        %v904 = vpop.f32.mrb[0].mxu0
        %905 = vdwg.mxu0
        %907 = vrot.lane.b32.xlu0 %v903, 16
        %v908 = vpop.permute.xlu0 %907
        %vm910 = vcmask 195712
        %911 = vst.msk [vmem:[#allocation2] sm:$0xff] %vm910, %v908
        %912 = vrot.lane.b32.xlu0 %v396, 104
        %v913 = vpop.permute.xlu0 %912
        %914 = vrot.lane.b32.xlu0 %v396, 72
        %v915 = vpop.permute.xlu0 %914
        %v916 = vsel %vm402, %v913, 0
        %v918 = vsel %vm402, %v915, 0
        %920 = vmatprep.subr.mxu0 0.0
        %921 = vmatpush1.xpose.msra.mxu0 %v918
        %922 = vmatprep.subr.mxu0 0.0
        %923 = vmatpush1.xpose.msra.mxu0 0.0
        %924 = vmatprep.subr.mxu0 0.0
        %925 = vmatpush1.xpose.msra.mxu0 0.0
        %926 = vmatprep.subr.mxu0 0.0
        %927 = vmatpush1.xpose.msra.mxu0 0.0
        %928 = vmatprep.subr.mxu0 0.0
        %929 = vmatpush1.xpose.msra.mxu0 0.0
        %930 = vmatprep.subr.mxu0 0.0
        %931 = vmatpush1.xpose.msra.mxu0 0.0
        %932 = vmatprep.subr.mxu0 0.0
        %933 = vmatpush1.xpose.msra.mxu0 0.0
        %934 = vmatprep.subr.mxu0 0.0
        %935 = vmatpush1.xpose.msra.mxu0 0.0
        %936 = vmatprep.subr.mxu0 0.0
        %937 = vmatpush1.xpose.msra.mxu0 0.0
        %938 = vmatprep.subr.mxu0 0.0
        %939 = vmatpush1.xpose.msra.mxu0 0.0
        %940 = vmatprep.subr.mxu0 0.0
        %941 = vmatpush1.xpose.msra.mxu0 0.0
        %942 = vmatprep.subr.mxu0 0.0
        %943 = vmatpush1.xpose.msra.mxu0 0.0
        %944 = vmatprep.subr.mxu0 0.0
        %945 = vmatpush1.xpose.msra.mxu0 0.0
        %946 = vmatprep.subr.mxu0 0.0
        %947 = vmatpush1.xpose.msra.mxu0 0.0
        %948 = vmatprep.subr.mxu0 0.0
        %949 = vmatpush1.xpose.msra.mxu0 0.0
        %950 = vmatprep.subr.mxu0 0.0
        %951 = vmatpush1.xpose.msra.mxu0 0.0
        %952 = vmatprep.subr.mxu0 0.0
        %953 = vmatpush1.xpose.msra.mxu0 0.0
        %954 = vmatprep.subr.mxu0 0.0
        %955 = vmatpush1.xpose.msra.mxu0 0.0
        %956 = vmatprep.subr.mxu0 0.0
        %957 = vmatpush1.xpose.msra.mxu0 0.0
        %958 = vmatprep.subr.mxu0 0.0
        %959 = vmatpush1.xpose.msra.mxu0 0.0
        %960 = vmatprep.subr.mxu0 0.0
        %961 = vmatpush1.xpose.msra.mxu0 0.0
        %962 = vmatprep.subr.mxu0 0.0
        %963 = vmatpush1.xpose.msra.mxu0 0.0
        %964 = vmatprep.subr.mxu0 0.0
        %965 = vmatpush1.xpose.msra.mxu0 0.0
        %966 = vmatprep.subr.mxu0 0.0
        %967 = vmatpush1.xpose.msra.mxu0 0.0
        %968 = vmatprep.subr.mxu0 0.0
        %969 = vmatpush1.xpose.msra.mxu0 0.0
        %970 = vmatprep.subr.mxu0 0.0
        %971 = vmatpush1.xpose.msra.mxu0 0.0
        %972 = vmatprep.subr.mxu0 0.0
        %973 = vmatpush1.xpose.msra.mxu0 0.0
        %974 = vmatprep.subr.mxu0 0.0
        %975 = vmatpush1.xpose.msra.mxu0 0.0
        %976 = vmatprep.subr.mxu0 0.0
        %977 = vmatpush1.xpose.msra.mxu0 0.0
        %978 = vmatprep.subr.mxu0 0.0
        %979 = vmatpush1.xpose.msra.mxu0 0.0
        %980 = vmatprep.subr.mxu0 0.0
        %981 = vmatpush1.xpose.msra.mxu0 0.0
        %982 = vmatprep.subr.mxu0 0.0
        %983 = vmatpush1.xpose.msra.mxu0 0.0
        %984 = vmatprep.mubr.f32.mxu0 0.0
        %985 = vmatmul.mubr.f32.gmra.mrb[0].mxu0 %v916
        %v986 = vpop.f32.mrb[0].mxu0
        %v987 = vadd.f32 0.0, %v986
        %v988 = vpop.f32.mrb[0].mxu0
        %989 = vdwg.mxu0
        %s990 = scalar_lea.vmem %s289, 24 [#allocation3]
        %991 = vst.msk [vmem:[%s990] sm:$0xff] %vm402, %v987
        %v992 = vsel %vm402, %v987, -inf
        %993 = vmax.xlane.f32.xlu0 %v992
        %v994 = vpop.xlane.xlu0 %993
        %v995 = vsub.f32 %v987, %v994
        %v996 = vmul.f32 %v995, 1.442695
        %v997 = vpow.pop %v996
        %v998 = vsel %vm402, %v997, 0.0
        %999 = vadd.xlane.f32.xlu0 %v998
        %v1000 = vpop.xlane.xlu0 %999
        %v1001 = vrcp.pop %v1000
        %v1002 = vmul.f32 %v997, %v1001
        %1003 = vrot.lane.b32.xlu0 %v396, 40
        %v1004 = vpop.permute.xlu0 %1003
        %v1007 = vsel %vm402, %v1002, 0
        %1009 = vmatprep.subr.mxu0 0.0
        %1010 = vmatpush1.msra.mxu0 %v1004
        %1011 = vmatprep.subr.mxu0 0.0
        %1012 = vmatpush1.msra.mxu0 0.0
        %1013 = vmatprep.subr.mxu0 0.0
        %1014 = vmatpush1.msra.mxu0 0.0
        %1015 = vmatprep.subr.mxu0 0.0
        %1016 = vmatpush1.msra.mxu0 0.0
        %1017 = vmatprep.subr.mxu0 0.0
        %1018 = vmatpush1.msra.mxu0 0.0
        %1019 = vmatprep.subr.mxu0 0.0
        %1020 = vmatpush1.msra.mxu0 0.0
        %1021 = vmatprep.subr.mxu0 0.0
        %1022 = vmatpush1.msra.mxu0 0.0
        %1023 = vmatprep.subr.mxu0 0.0
        %1024 = vmatpush1.msra.mxu0 0.0
        %1025 = vmatprep.subr.mxu0 0.0
        %1026 = vmatpush1.msra.mxu0 0.0
        %1027 = vmatprep.subr.mxu0 0.0
        %1028 = vmatpush1.msra.mxu0 0.0
        %1029 = vmatprep.subr.mxu0 0.0
        %1030 = vmatpush1.msra.mxu0 0.0
        %1031 = vmatprep.subr.mxu0 0.0
        %1032 = vmatpush1.msra.mxu0 0.0
        %1033 = vmatprep.subr.mxu0 0.0
        %1034 = vmatpush1.msra.mxu0 0.0
        %1035 = vmatprep.subr.mxu0 0.0
        %1036 = vmatpush1.msra.mxu0 0.0
        %1037 = vmatprep.subr.mxu0 0.0
        %1038 = vmatpush1.msra.mxu0 0.0
        %1039 = vmatprep.subr.mxu0 0.0
        %1040 = vmatpush1.msra.mxu0 0.0
        %1041 = vmatprep.subr.mxu0 0.0
        %1042 = vmatpush1.msra.mxu0 0.0
        %1043 = vmatprep.subr.mxu0 0.0
        %1044 = vmatpush1.msra.mxu0 0.0
        %1045 = vmatprep.subr.mxu0 0.0
        %1046 = vmatpush1.msra.mxu0 0.0
        %1047 = vmatprep.subr.mxu0 0.0
        %1048 = vmatpush1.msra.mxu0 0.0
        %1049 = vmatprep.subr.mxu0 0.0
        %1050 = vmatpush1.msra.mxu0 0.0
        %1051 = vmatprep.subr.mxu0 0.0
        %1052 = vmatpush1.msra.mxu0 0.0
        %1053 = vmatprep.subr.mxu0 0.0
        %1054 = vmatpush1.msra.mxu0 0.0
        %1055 = vmatprep.subr.mxu0 0.0
        %1056 = vmatpush1.msra.mxu0 0.0
        %1057 = vmatprep.subr.mxu0 0.0
        %1058 = vmatpush1.msra.mxu0 0.0
        %1059 = vmatprep.subr.mxu0 0.0
        %1060 = vmatpush1.msra.mxu0 0.0
        %1061 = vmatprep.subr.mxu0 0.0
        %1062 = vmatpush1.msra.mxu0 0.0
        %1063 = vmatprep.subr.mxu0 0.0
        %1064 = vmatpush1.msra.mxu0 0.0
        %1065 = vmatprep.subr.mxu0 0.0
        %1066 = vmatpush1.msra.mxu0 0.0
        %1067 = vmatprep.subr.mxu0 0.0
        %1068 = vmatpush1.msra.mxu0 0.0
        %1069 = vmatprep.subr.mxu0 0.0
        %1070 = vmatpush1.msra.mxu0 0.0
        %1071 = vmatprep.subr.mxu0 0.0
        %1072 = vmatpush1.msra.mxu0 0.0
        %1073 = vmatprep.mubr.f32.mxu0 0.0
        %1074 = vmatmul.mubr.f32.gmra.mrb[0].mxu0 %v1007
        %v1075 = vpop.f32.mrb[0].mxu0
        %v1076 = vadd.f32 0.0, %v1075
        %v1077 = vpop.f32.mrb[0].mxu0
        %1078 = vdwg.mxu0
        %1080 = vrot.lane.b32.xlu0 %v1076, 24
        %v1081 = vpop.permute.xlu0 %1080
        %vm1083 = vcmask 261312
        %1084 = vst.msk [vmem:[#allocation2] sm:$0xff] %vm1083, %v1081
        %v1085 = vld [vmem:[#allocation2] sm:$0xff]
        %v1086 = vld [vmem:[%s4] sm:$0xff]
        %v1087 = vld [vmem:[%s4 + $0x8] sm:$0xff]
        %v1088 = vld [vmem:[%s4 + $0x10] sm:$0xff]
        %v1089 = vld [vmem:[%s4 + $0x18] sm:$0xff]
        %v1090 = vld [vmem:[%s5] sm:$0x1]
        %v1092 = vlaneseq
        %v1093 = vshrl.u32 %v1092, 7
        %v1094 = vsub.s32 0, %v1093
        %v1095 = vrot.slane %v1090, %v1094
        %v1098 = vsel %vm308, %v1085, 0
        %1100 = vmatprep.subr.mxu0 0.0
        %1101 = vmatpush1.msra.mxu0 %v1086
        %1102 = vmatprep.subr.mxu0 0.0
        %1103 = vmatpush1.msra.mxu0 %v1087
        %1104 = vmatprep.subr.mxu0 0.0
        %1105 = vmatpush1.msra.mxu0 %v1088
        %1106 = vmatprep.subr.mxu0 0.0
        %1107 = vmatpush1.msra.mxu0 %v1089
        %1108 = vmatprep.subr.mxu0 0.0
        %1109 = vmatpush1.msra.mxu0 0.0
        %1110 = vmatprep.subr.mxu0 0.0
        %1111 = vmatpush1.msra.mxu0 0.0
        %1112 = vmatprep.subr.mxu0 0.0
        %1113 = vmatpush1.msra.mxu0 0.0
        %1114 = vmatprep.subr.mxu0 0.0
        %1115 = vmatpush1.msra.mxu0 0.0
        %1116 = vmatprep.subr.mxu0 0.0
        %1117 = vmatpush1.msra.mxu0 0.0
        %1118 = vmatprep.subr.mxu0 0.0
        %1119 = vmatpush1.msra.mxu0 0.0
        %1120 = vmatprep.subr.mxu0 0.0
        %1121 = vmatpush1.msra.mxu0 0.0
        %1122 = vmatprep.subr.mxu0 0.0
        %1123 = vmatpush1.msra.mxu0 0.0
        %1124 = vmatprep.subr.mxu0 0.0
        %1125 = vmatpush1.msra.mxu0 0.0
        %1126 = vmatprep.subr.mxu0 0.0
        %1127 = vmatpush1.msra.mxu0 0.0
        %1128 = vmatprep.subr.mxu0 0.0
        %1129 = vmatpush1.msra.mxu0 0.0
        %1130 = vmatprep.subr.mxu0 0.0
        %1131 = vmatpush1.msra.mxu0 0.0
        %1132 = vmatprep.subr.mxu0 0.0
        %1133 = vmatpush1.msra.mxu0 0.0
        %1134 = vmatprep.subr.mxu0 0.0
        %1135 = vmatpush1.msra.mxu0 0.0
        %1136 = vmatprep.subr.mxu0 0.0
        %1137 = vmatpush1.msra.mxu0 0.0
        %1138 = vmatprep.subr.mxu0 0.0
        %1139 = vmatpush1.msra.mxu0 0.0
        %1140 = vmatprep.subr.mxu0 0.0
        %1141 = vmatpush1.msra.mxu0 0.0
        %1142 = vmatprep.subr.mxu0 0.0
        %1143 = vmatpush1.msra.mxu0 0.0
        %1144 = vmatprep.subr.mxu0 0.0
        %1145 = vmatpush1.msra.mxu0 0.0
        %1146 = vmatprep.subr.mxu0 0.0
        %1147 = vmatpush1.msra.mxu0 0.0
        %1148 = vmatprep.subr.mxu0 0.0
        %1149 = vmatpush1.msra.mxu0 0.0
        %1150 = vmatprep.subr.mxu0 0.0
        %1151 = vmatpush1.msra.mxu0 0.0
        %1152 = vmatprep.subr.mxu0 0.0
        %1153 = vmatpush1.msra.mxu0 0.0
        %1154 = vmatprep.subr.mxu0 0.0
        %1155 = vmatpush1.msra.mxu0 0.0
        %1156 = vmatprep.subr.mxu0 0.0
        %1157 = vmatpush1.msra.mxu0 0.0
        %1158 = vmatprep.subr.mxu0 0.0
        %1159 = vmatpush1.msra.mxu0 0.0
        %1160 = vmatprep.subr.mxu0 0.0
        %1161 = vmatpush1.msra.mxu0 0.0
        %1162 = vmatprep.subr.mxu0 0.0
        %1163 = vmatpush1.msra.mxu0 0.0
        %1164 = vmatprep.mubr.f32.mxu0 0.0
        %1165 = vmatmul.mubr.f32.gmra.mrb[0].mxu0 %v1098
        %v1166 = vpop.f32.mrb[0].mxu0
        %v1167 = vadd.f32 %v1095, %v1166
        %v1168 = vpop.f32.mrb[0].mxu0
        %1169 = vdwg.mxu0
        %v1170 = vadd.f32 %v1167, %v302
        %1171 = vst.msk [vmem:[%s301] sm:$0xff] %vm308, %v1170
        %p1172 = scmp.lt.s32.totalorder %s22, 1
        %s1173 = scalar_select %p1172, %s22, 1
        %s1174 = smul.addr %s1173, 8
        %s1175 = scalar_lea.vmem %s6, %s1174
        %s1176 = sand.u32 %s192, 1
        %s1177 = scalar_lea.sflag [#allocation4], %s1176
        %s1178 = sand.u32 %s192, 1
        %s1179 = smul.addr %s1178, 32
        %s1180 = scalar_lea.vmem [#allocation3], %s1179
        // Predicated region
        $region45: #{ks_conditional_self_attention.1} parent=43 // pred_check
          %p1181 = pneg %p176
        $region46: #{ks_conditional_self_attention.1} parent=43 // pred_check_branch
          %1183 = sbr.rel (%p1181) target = $region48
        $region47: #{ks_conditional_self_attention.1} parent=43 // pred_region
          _
        $region48: #{ks_conditional_self_attention.1} parent=43 // pred_fallthru
          _
        // Predicated region
        $region49: #{ks_conditional_self_attention.1} parent=43 // pred_check
          %p1184 = pneg %p202
        $region50: #{ks_conditional_self_attention.1} parent=43 // pred_check_branch
          %1186 = sbr.rel (%p1184) target = $region52
        $region51: #{ks_conditional_self_attention.1} parent=43 // pred_region
          %s1188 = ssub.s32 512, 512
          %1189 = vsyncadd %s1177, %s1188
          %s1190 = smul.addr %s22, 4
          %s1191 = smul.addr %s1190, 128
          %s1192 = scalar_lea.hbm %s7, %s1191
          %s1193 = sshll.u32 %s1180, 4
          %s1194 = int_to_ptr.vmem [resolvable:$true] %s1193
          %1199 = dma.vmem_to_hbm [thread:$0]  %s1194, 512, %s1192, %s1177, 128, 128, 8
        $region52: #{ks_conditional_self_attention.1} parent=43 // pred_fallthru
          _
      $region44: #{ks_conditional_self_attention.1} parent=5 // pred_fallthru
        _
      %p1200 = scmp.le.s32.totalorder 2, %s17
      // Predicated region
      $region53: #{ks_conditional_self_attention.1} parent=5 // pred_check
        %p1201 = pneg %p1200
      $region54: #{ks_conditional_self_attention.1} parent=5 // pred_check_branch
        %1203 = sbr.rel (%p1201) target = $region56
      $region55: #{ks_conditional_self_attention.1} parent=5 // pred_region
        %s1204 = ssub.s32 %s17, 2
        // Predicated region
        $region57: #{ks_conditional_self_attention.1} parent=55 // pred_check
          %p1205 = pneg %p182
        $region58: #{ks_conditional_self_attention.1} parent=55 // pred_check_branch
          %1207 = sbr.rel (%p1205) target = $region60
        $region59: #{ks_conditional_self_attention.1} parent=55 // pred_region
          %p1208 = scmp.lt.s32.totalorder %s23, 1
          %s1209 = scalar_select %p1208, %s23, 1
          %s1210 = smul.addr %s1209, 8
          %s1211 = scalar_lea.vmem %s6, %s1210
        $region60: #{ks_conditional_self_attention.1} parent=55 // pred_fallthru
          _
        // Predicated region
        $region61: #{ks_conditional_self_attention.1} parent=55 // pred_check
          %p1212 = pneg %p208
        $region62: #{ks_conditional_self_attention.1} parent=55 // pred_check_branch
          %1214 = sbr.rel (%p1212) target = $region64
        $region63: #{ks_conditional_self_attention.1} parent=55 // pred_region
          %s1215 = sand.u32 %s193, 1
          %s1216 = scalar_lea.sflag [#allocation4], %s1215
          %s1217 = sand.u32 %s193, 1
          %s1218 = smul.addr %s1217, 32
          %s1219 = scalar_lea.vmem [#allocation3], %s1218
          %1220 = dma.done %s1216, 512
        $region64: #{ks_conditional_self_attention.1} parent=55 // pred_fallthru
          _
      $region56: #{ks_conditional_self_attention.1} parent=5 // pred_fallthru
        _
    $region6: #{ks_conditional_self_attention.1} parent=1 // loop_footer
      %s21 = sadd.s32 1, %s17
    $region7: #{ks_conditional_self_attention.1} parent=1 // loop_footer_branch
      %16 = sbr.rel target = $region3
    $region8: #{ks_conditional_self_attention.1} parent=1 // loop_exit
      _
    %1221 = vsyncpa [#allocation4], 1
    %s1222 = scalar_lea.sflag [#allocation4], 1
    %1223 = vsyncpa %s1222, 1

</llo_original>
